<compile_context>
chip_gen: v5e
topology: v5e:2x2
jax: 0.10.0
libtpu: 0.0.40
codegen_flags: <defaults>
</compile_context>

<pallas_src>
import functools

import jax
import jax.numpy as jnp
from jax import lax
from jax.experimental import pallas as pl
from jax.experimental.pallas import tpu as pltpu

_LANE = 128
_SUBLANE = 8


def _round_up(n, m):
    return ((n + m - 1) // m) * m


def rnn_kernel(x_ref, wih_ref, bias_ref, whh_ref, h_ref, *, seq_len, needs_mask, unroll):
    """One (batch-block, time-block) grid step of the transposed tanh-RNN recurrence.

    x_ref   : (block_t, bb)        raw input slice; time on sublanes, batch on lanes
    wih_ref : (hidden_p, 1)        W_ih[:, 0] column (input_size == 1), zero padded
    bias_ref: (hidden_p, 1)        b_ih + b_hh column, zero padded
    whh_ref : (hidden_p, hidden_p) W_hh (un-transposed: recurrence runs on h^T)
    h_ref   : (hidden_p, bb)       h^T; resident output block carried across the time
                                   grid axis (accumulator pattern, written back once)
    """
    t_blk = pl.program_id(1)
    block_t = x_ref.shape[0]

    @pl.when(t_blk == 0)
    def _init():
        h_ref[...] = jnp.zeros_like(h_ref)

    # Loop invariants (their block indices never change, so the underlying VMEM tiles
    # are fetched once for the whole grid).
    whh = whh_ref[...]
    wih = wih_ref[...]
    bias = bias_ref[...]
    t0 = t_blk * block_t

    def step(i, h):
        # In-kernel input projection (VPU): x_t is one value per batch lane, broadcast
        # against the W_ih column.  Independent of h, so it hides under MXU/EUP latency.
        x_row = x_ref[pl.ds(i, 1), :]                    # (1, bb) dynamic sublane slice
        xproj = wih * x_row + bias                       # (hidden_p, bb)
        # Serial chain: MXU matmul -> VPU add -> EUP tanh.
        h_new = jnp.tanh(xproj + jnp.dot(whh, h, preferred_element_type=jnp.float32))
        if needs_mask:
            # seq was rounded up to the time block: padded timesteps are no-ops.
            h_new = jnp.where(t0 + i < seq_len, h_new, h)
        return h_new

    # Bounded partial unroll: enough to overlap the next steps' x loads / projections
    # with the serial MXU->VPU->EUP chain without exploding code size at long seq.
    h_ref[...] = lax.fori_loop(0, block_t, step, h_ref[...], unroll=unroll)
    # TODO(synk): if bundle dumps show W_hh re-staged into the MXU every step, switch to
    # pltpu.matmul_push_rhs / matmul_acc_lhs / matmul_pop to keep it weight-stationary.


def rnn_model_forward(x, params, block_t=None):
    """x: (batch, seq) float32. Returns (batch, output_size). Matches RNNModel.forward."""
    w_ih, w_hh, b_ih, b_hh, w_fc, b_fc = (
        params["w_ih"], params["w_hh"], params["b_ih"],
        params["b_hh"], params["w_fc"], params["b_fc"],
    )
    assert w_ih.shape[1] == 1, "RNNModel.forward unsqueezes x to input_size == 1"
    batch, seq = x.shape
    hidden = w_hh.shape[0]

    # One 128-lane contraction tile for hidden (kernel is latency-bound, never pad more);
    # batch sits on the lane axis of h^T, only sublane alignment needed for the x stream.
    hidden_p = max(_round_up(hidden, _LANE), _LANE)
    batch_p = max(_round_up(batch, _SUBLANE), _SUBLANE)

    # Time-axis streaming block: multiple of 8 sublanes, capped at 512 (2 buffers of
    # block_t*batch_p*4 B stay tiny vs. v7x's 64 MiB VMEM even for very large batch).
    if block_t is None:
        block_t = 512
    block_t = max(_SUBLANE, _round_up(min(block_t, _round_up(seq, _SUBLANE)), _SUBLANE))
    seq_pad = _round_up(seq, block_t)
    n_t = seq_pad // block_t

    # Split the batch (lane) axis only when each block stays lane-dense (>=128 lanes);
    # that axis is marked "parallel" so v7x's two TensorCores take independent slices.
    bb = batch_p // 2 if batch_p % 256 == 0 else batch_p
    n_b = batch_p // bb

    f32 = jnp.float32
    # Single-pass padding with jnp.pad (no zeros + dynamic_update_slice double pass).
    x_t = jnp.pad(x.T.astype(f32), ((0, seq_pad - seq), (0, batch_p - batch)))      # (seq_pad, batch_p)
    wih_col = jnp.pad(w_ih.astype(f32)[:, :1], ((0, hidden_p - hidden), (0, 0)))     # (hidden_p, 1)
    bias_col = jnp.pad((b_ih + b_hh).astype(f32)[:, None],
                       ((0, hidden_p - hidden), (0, 0)))                             # (hidden_p, 1)
    whh_p = jnp.pad(w_hh.astype(f32),
                    ((0, hidden_p - hidden), (0, hidden_p - hidden)))                # (hidden_p, hidden_p)

    kernel = functools.partial(
        rnn_kernel, seq_len=seq, needs_mask=(seq_pad != seq), unroll=min(8, block_t))

    h_t = pl.pallas_call(
        kernel,
        out_shape=jax.ShapeDtypeStruct((hidden_p, batch_p), f32),
        grid_spec=pltpu.PrefetchScalarGridSpec(
            num_scalar_prefetch=0,
            grid=(n_b, n_t),
            in_specs=[
                pl.BlockSpec((block_t, bb), lambda b, t: (t, b)),          # streamed raw x
                pl.BlockSpec((hidden_p, 1), lambda b, t: (0, 0)),          # W_ih column (resident)
                pl.BlockSpec((hidden_p, 1), lambda b, t: (0, 0)),          # fused bias (resident)
                pl.BlockSpec((hidden_p, hidden_p), lambda b, t: (0, 0)),   # W_hh (resident)
            ],
            out_specs=pl.BlockSpec((hidden_p, bb), lambda b, t: (0, b)),   # h^T carry
        ),
        compiler_params=pltpu.CompilerParams(
            dimension_semantics=("parallel", "arbitrary")),
    )(x_t, wih_col, bias_col, whh_p)

    # Final FC (hidden -> output_size) in XLA: avoids a degenerate N=1 MXU matmul and
    # masked 1-lane stores inside the kernel.
    h_last = h_t[:hidden, :batch].T                       # (batch, hidden)
    return h_last @ w_fc.T + b_fc[None, :]


def init_params(key, input_size, hidden_size, output_size):
    """Deterministic init mimicking PyTorch's U(-1/sqrt(hidden), 1/sqrt(hidden))."""
    ks = jax.random.split(key, 6)
    bound = 1.0 / jnp.sqrt(hidden_size)
    u = lambda k, shape, b: jax.random.uniform(k, shape, jnp.float32, -b, b)
    return {
        "w_ih": u(ks[0], (hidden_size, input_size), bound),
        "w_hh": u(ks[1], (hidden_size, hidden_size), bound),
        "b_ih": u(ks[2], (hidden_size,), bound),
        "b_hh": u(ks[3], (hidden_size,), bound),
        "w_fc": u(ks[4], (output_size, hidden_size), bound),
        "b_fc": u(ks[5], (output_size,), bound),
    }


def reference_forward(x, params):
    """Pure-JAX reference of the PyTorch forward, for a sanity check."""
    w_ih, w_hh, b_ih, b_hh, w_fc, b_fc = (
        params["w_ih"], params["w_hh"], params["b_ih"],
        params["b_hh"], params["w_fc"], params["b_fc"],
    )
    batch, seq = x.shape
    hidden = w_hh.shape[0]
    xs = x[:, :, None]  # (batch, seq, 1)
    h = jnp.zeros((batch, hidden), jnp.float32)
    for t in range(seq):
        h = jnp.tanh(xs[:, t, :] @ w_ih.T + h @ w_hh.T + b_ih + b_hh)
    return h @ w_fc.T + b_fc


if __name__ == "__main__":
    # Small shapes consistent with the module; seq=12 with block_t=8 exercises both the
    # streaming time grid (2 blocks) and the padded-timestep masking path.
    batch, seq = 4, 12
    input_size, hidden_size, output_size = 1, 32, 1

    key = jax.random.PRNGKey(0)
    k_x, k_p = jax.random.split(key)
    x = jax.random.normal(k_x, (batch, seq), dtype=jnp.float32)
    params = init_params(k_p, input_size, hidden_size, output_size)

    out = rnn_model_forward(x, params, block_t=8)
    out = jax.block_until_ready(out)

    ref = reference_forward(x, params)
    assert out.shape == (batch, output_size)
    assert jnp.allclose(out, ref, atol=1e-4, rtol=1e-4)

    print("KERNEL_OK")
</pallas_src>

<mosaic_0001>
module attributes {stable_mosaic.version = 11 : i64} {
  func.func @rnn_kernel(%arg0: i32, %arg1: i32, %arg2: memref<8x8xf32, #tpu.memory_space<vmem>>, %arg3: memref<128x1xf32, #tpu.memory_space<vmem>>, %arg4: memref<128x1xf32, #tpu.memory_space<vmem>>, %arg5: memref<128x128xf32, #tpu.memory_space<vmem>>, %arg6: memref<128x8xf32, #tpu.memory_space<vmem>>) attributes {dimension_semantics = [#tpu.dimension_semantics<parallel>, #tpu.dimension_semantics<arbitrary>], iteration_bounds = array<i64: 1, 2>, scalar_prefetch = 0 : i64, scratch_operands = 0 : i64, tpu.core_type = #tpu.core_type<tc>, window_params = [{transform_indices = @transform_0, window_bounds = array<i64: 8, 8>}, {pipeline_mode = #tpu.pipeline_mode<synchronous>, transform_indices = @transform_1, window_bounds = array<i64: 128, 1>}, {pipeline_mode = #tpu.pipeline_mode<synchronous>, transform_indices = @transform_2, window_bounds = array<i64: 128, 1>}, {pipeline_mode = #tpu.pipeline_mode<synchronous>, transform_indices = @transform_3, window_bounds = array<i64: 128, 128>}, {transform_indices = @transform_4, window_bounds = array<i64: 128, 8>}]} {
    %c0_i32 = arith.constant 0 : i32
    %0 = arith.cmpi eq, %arg1, %c0_i32 : i32
    %1 = arith.extui %0 : i1 to i32
    %c0_i32_0 = arith.constant 0 : i32
    %2 = arith.cmpi ne, %1, %c0_i32_0 : i32
    scf.if %2 {
      %cst_34 = arith.constant 0.000000e+00 : f32
      %113 = vector.broadcast %cst_34 : f32 to vector<128x8xf32>
      %c0_35 = arith.constant 0 : index
      %c0_36 = arith.constant 0 : index
      %114 = vector.load %arg6[%c0_35, %c0_36] : memref<128x8xf32, #tpu.memory_space<vmem>>, vector<128x8xf32>
      tpu.vector_store %arg6[%c0_35, %c0_36], %113 {strides = array<i32>} : memref<128x8xf32, #tpu.memory_space<vmem>>, vector<128x8xf32>,
    } else {
    }
    %c0 = arith.constant 0 : index
    %c0_1 = arith.constant 0 : index
    %3 = vector.load %arg5[%c0, %c0_1] : memref<128x128xf32, #tpu.memory_space<vmem>>, vector<128x128xf32>
    %c0_2 = arith.constant 0 : index
    %c0_3 = arith.constant 0 : index
    %4 = vector.load %arg3[%c0_2, %c0_3] : memref<128x1xf32, #tpu.memory_space<vmem>>, vector<128x1xf32>
    %c0_4 = arith.constant 0 : index
    %c0_5 = arith.constant 0 : index
    %5 = vector.load %arg4[%c0_4, %c0_5] : memref<128x1xf32, #tpu.memory_space<vmem>>, vector<128x1xf32>
    %c8_i32 = arith.constant 8 : i32
    %6 = arith.muli %arg1, %c8_i32 : i32
    %c0_6 = arith.constant 0 : index
    %c0_7 = arith.constant 0 : index
    %7 = vector.load %arg6[%c0_6, %c0_7] : memref<128x8xf32, #tpu.memory_space<vmem>>, vector<128x8xf32>
    %c0_i32_8 = arith.constant 0 : i32
    %8 = arith.index_cast %c0_i32_8 : i32 to index
    %c0_9 = arith.constant 0 : index
    %9 = vector.load %arg2[%8, %c0_9] : memref<8x8xf32, #tpu.memory_space<vmem>>, vector<1x8xf32>
    %10 = vector.broadcast %4 : vector<128x1xf32> to vector<128x8xf32>
    %11 = vector.broadcast %9 : vector<1x8xf32> to vector<128x8xf32>
    %12 = arith.mulf %10, %11 : vector<128x8xf32>
    %13 = vector.broadcast %5 : vector<128x1xf32> to vector<128x8xf32>
    %14 = arith.addf %12, %13 : vector<128x8xf32>
    %cst = arith.constant dense<0.000000e+00> : vector<128x8xf32>
    %15 = tpu.matmul %3, %7, %cst {dimension_numbers = #tpu.dot_dimension_numbers<[1], [0], [0], [1], [0, 0, 1, 1], [], []>} : vector<128x128xf32>, vector<128x8xf32>, vector<128x8xf32> -> vector<128x8xf32>
    %16 = arith.addf %14, %15 : vector<128x8xf32>
    %17 = math.tanh %16 : vector<128x8xf32>
    %18 = arith.addi %6, %c0_i32_8 : i32
    %c12_i32 = arith.constant 12 : i32
    %19 = arith.cmpi slt, %18, %c12_i32 : i32
    %20 = arith.select %19, %17, %7 : vector<128x8xf32>
    %c1_i32 = arith.constant 1 : i32
    %21 = arith.index_cast %c1_i32 : i32 to index
    %c0_10 = arith.constant 0 : index
    %22 = vector.load %arg2[%21, %c0_10] : memref<8x8xf32, #tpu.memory_space<vmem>>, vector<1x8xf32>
    %23 = vector.broadcast %4 : vector<128x1xf32> to vector<128x8xf32>
    %24 = vector.broadcast %22 : vector<1x8xf32> to vector<128x8xf32>
    %25 = arith.mulf %23, %24 : vector<128x8xf32>
    %26 = vector.broadcast %5 : vector<128x1xf32> to vector<128x8xf32>
    %27 = arith.addf %25, %26 : vector<128x8xf32>
    %cst_11 = arith.constant dense<0.000000e+00> : vector<128x8xf32>
    %28 = tpu.matmul %3, %20, %cst_11 {dimension_numbers = #tpu.dot_dimension_numbers<[1], [0], [0], [1], [0, 0, 1, 1], [], []>} : vector<128x128xf32>, vector<128x8xf32>, vector<128x8xf32> -> vector<128x8xf32>
    %29 = arith.addf %27, %28 : vector<128x8xf32>
    %30 = math.tanh %29 : vector<128x8xf32>
    %31 = arith.addi %6, %c1_i32 : i32
    %c12_i32_12 = arith.constant 12 : i32
    %32 = arith.cmpi slt, %31, %c12_i32_12 : i32
    %33 = arith.select %32, %30, %20 : vector<128x8xf32>
    %c2_i32 = arith.constant 2 : i32
    %34 = arith.index_cast %c2_i32 : i32 to index
    %c0_13 = arith.constant 0 : index
    %35 = vector.load %arg2[%34, %c0_13] : memref<8x8xf32, #tpu.memory_space<vmem>>, vector<1x8xf32>
    %36 = vector.broadcast %4 : vector<128x1xf32> to vector<128x8xf32>
    %37 = vector.broadcast %35 : vector<1x8xf32> to vector<128x8xf32>
    %38 = arith.mulf %36, %37 : vector<128x8xf32>
    %39 = vector.broadcast %5 : vector<128x1xf32> to vector<128x8xf32>
    %40 = arith.addf %38, %39 : vector<128x8xf32>
    %cst_14 = arith.constant dense<0.000000e+00> : vector<128x8xf32>
    %41 = tpu.matmul %3, %33, %cst_14 {dimension_numbers = #tpu.dot_dimension_numbers<[1], [0], [0], [1], [0, 0, 1, 1], [], []>} : vector<128x128xf32>, vector<128x8xf32>, vector<128x8xf32> -> vector<128x8xf32>
    %42 = arith.addf %40, %41 : vector<128x8xf32>
    %43 = math.tanh %42 : vector<128x8xf32>
    %44 = arith.addi %6, %c2_i32 : i32
    %c12_i32_15 = arith.constant 12 : i32
    %45 = arith.cmpi slt, %44, %c12_i32_15 : i32
    %46 = arith.select %45, %43, %33 : vector<128x8xf32>
    %c3_i32 = arith.constant 3 : i32
    %47 = arith.index_cast %c3_i32 : i32 to index
    %c0_16 = arith.constant 0 : index
    %48 = vector.load %arg2[%47, %c0_16] : memref<8x8xf32, #tpu.memory_space<vmem>>, vector<1x8xf32>
    %49 = vector.broadcast %4 : vector<128x1xf32> to vector<128x8xf32>
    %50 = vector.broadcast %48 : vector<1x8xf32> to vector<128x8xf32>
    %51 = arith.mulf %49, %50 : vector<128x8xf32>
    %52 = vector.broadcast %5 : vector<128x1xf32> to vector<128x8xf32>
    %53 = arith.addf %51, %52 : vector<128x8xf32>
    %cst_17 = arith.constant dense<0.000000e+00> : vector<128x8xf32>
    %54 = tpu.matmul %3, %46, %cst_17 {dimension_numbers = #tpu.dot_dimension_numbers<[1], [0], [0], [1], [0, 0, 1, 1], [], []>} : vector<128x128xf32>, vector<128x8xf32>, vector<128x8xf32> -> vector<128x8xf32>
    %55 = arith.addf %53, %54 : vector<128x8xf32>
    %56 = math.tanh %55 : vector<128x8xf32>
    %57 = arith.addi %6, %c3_i32 : i32
    %c12_i32_18 = arith.constant 12 : i32
    %58 = arith.cmpi slt, %57, %c12_i32_18 : i32
    %59 = arith.select %58, %56, %46 : vector<128x8xf32>
    %c4_i32 = arith.constant 4 : i32
    %60 = arith.index_cast %c4_i32 : i32 to index
    %c0_19 = arith.constant 0 : index
    %61 = vector.load %arg2[%60, %c0_19] : memref<8x8xf32, #tpu.memory_space<vmem>>, vector<1x8xf32>
    %62 = vector.broadcast %4 : vector<128x1xf32> to vector<128x8xf32>
    %63 = vector.broadcast %61 : vector<1x8xf32> to vector<128x8xf32>
    %64 = arith.mulf %62, %63 : vector<128x8xf32>
    %65 = vector.broadcast %5 : vector<128x1xf32> to vector<128x8xf32>
    %66 = arith.addf %64, %65 : vector<128x8xf32>
    %cst_20 = arith.constant dense<0.000000e+00> : vector<128x8xf32>
    %67 = tpu.matmul %3, %59, %cst_20 {dimension_numbers = #tpu.dot_dimension_numbers<[1], [0], [0], [1], [0, 0, 1, 1], [], []>} : vector<128x128xf32>, vector<128x8xf32>, vector<128x8xf32> -> vector<128x8xf32>
    %68 = arith.addf %66, %67 : vector<128x8xf32>
    %69 = math.tanh %68 : vector<128x8xf32>
    %70 = arith.addi %6, %c4_i32 : i32
    %c12_i32_21 = arith.constant 12 : i32
    %71 = arith.cmpi slt, %70, %c12_i32_21 : i32
    %72 = arith.select %71, %69, %59 : vector<128x8xf32>
    %c5_i32 = arith.constant 5 : i32
    %73 = arith.index_cast %c5_i32 : i32 to index
    %c0_22 = arith.constant 0 : index
    %74 = vector.load %arg2[%73, %c0_22] : memref<8x8xf32, #tpu.memory_space<vmem>>, vector<1x8xf32>
    %75 = vector.broadcast %4 : vector<128x1xf32> to vector<128x8xf32>
    %76 = vector.broadcast %74 : vector<1x8xf32> to vector<128x8xf32>
    %77 = arith.mulf %75, %76 : vector<128x8xf32>
    %78 = vector.broadcast %5 : vector<128x1xf32> to vector<128x8xf32>
    %79 = arith.addf %77, %78 : vector<128x8xf32>
    %cst_23 = arith.constant dense<0.000000e+00> : vector<128x8xf32>
    %80 = tpu.matmul %3, %72, %cst_23 {dimension_numbers = #tpu.dot_dimension_numbers<[1], [0], [0], [1], [0, 0, 1, 1], [], []>} : vector<128x128xf32>, vector<128x8xf32>, vector<128x8xf32> -> vector<128x8xf32>
    %81 = arith.addf %79, %80 : vector<128x8xf32>
    %82 = math.tanh %81 : vector<128x8xf32>
    %83 = arith.addi %6, %c5_i32 : i32
    %c12_i32_24 = arith.constant 12 : i32
    %84 = arith.cmpi slt, %83, %c12_i32_24 : i32
    %85 = arith.select %84, %82, %72 : vector<128x8xf32>
    %c6_i32 = arith.constant 6 : i32
    %86 = arith.index_cast %c6_i32 : i32 to index
    %c0_25 = arith.constant 0 : index
    %87 = vector.load %arg2[%86, %c0_25] : memref<8x8xf32, #tpu.memory_space<vmem>>, vector<1x8xf32>
    %88 = vector.broadcast %4 : vector<128x1xf32> to vector<128x8xf32>
    %89 = vector.broadcast %87 : vector<1x8xf32> to vector<128x8xf32>
    %90 = arith.mulf %88, %89 : vector<128x8xf32>
    %91 = vector.broadcast %5 : vector<128x1xf32> to vector<128x8xf32>
    %92 = arith.addf %90, %91 : vector<128x8xf32>
    %cst_26 = arith.constant dense<0.000000e+00> : vector<128x8xf32>
    %93 = tpu.matmul %3, %85, %cst_26 {dimension_numbers = #tpu.dot_dimension_numbers<[1], [0], [0], [1], [0, 0, 1, 1], [], []>} : vector<128x128xf32>, vector<128x8xf32>, vector<128x8xf32> -> vector<128x8xf32>
    %94 = arith.addf %92, %93 : vector<128x8xf32>
    %95 = math.tanh %94 : vector<128x8xf32>
    %96 = arith.addi %6, %c6_i32 : i32
    %c12_i32_27 = arith.constant 12 : i32
    %97 = arith.cmpi slt, %96, %c12_i32_27 : i32
    %98 = arith.select %97, %95, %85 : vector<128x8xf32>
    %c7_i32 = arith.constant 7 : i32
    %99 = arith.index_cast %c7_i32 : i32 to index
    %c0_28 = arith.constant 0 : index
    %100 = vector.load %arg2[%99, %c0_28] : memref<8x8xf32, #tpu.memory_space<vmem>>, vector<1x8xf32>
    %101 = vector.broadcast %4 : vector<128x1xf32> to vector<128x8xf32>
    %102 = vector.broadcast %100 : vector<1x8xf32> to vector<128x8xf32>
    %103 = arith.mulf %101, %102 : vector<128x8xf32>
    %104 = vector.broadcast %5 : vector<128x1xf32> to vector<128x8xf32>
    %105 = arith.addf %103, %104 : vector<128x8xf32>
    %cst_29 = arith.constant dense<0.000000e+00> : vector<128x8xf32>
    %106 = tpu.matmul %3, %98, %cst_29 {dimension_numbers = #tpu.dot_dimension_numbers<[1], [0], [0], [1], [0, 0, 1, 1], [], []>} : vector<128x128xf32>, vector<128x8xf32>, vector<128x8xf32> -> vector<128x8xf32>
    %107 = arith.addf %105, %106 : vector<128x8xf32>
    %108 = math.tanh %107 : vector<128x8xf32>
    %109 = arith.addi %6, %c7_i32 : i32
    %c12_i32_30 = arith.constant 12 : i32
    %110 = arith.cmpi slt, %109, %c12_i32_30 : i32
    %111 = arith.select %110, %108, %98 : vector<128x8xf32>
    %c8_i32_31 = arith.constant 8 : i32
    %c0_32 = arith.constant 0 : index
    %c0_33 = arith.constant 0 : index
    %112 = vector.load %arg6[%c0_32, %c0_33] : memref<128x8xf32, #tpu.memory_space<vmem>>, vector<128x8xf32>
    tpu.vector_store %arg6[%c0_32, %c0_33], %111 {strides = array<i32>} : memref<128x8xf32, #tpu.memory_space<vmem>>, vector<128x8xf32>,
    return
  }
  func.func @transform_0(%arg0: i32, %arg1: i32) -> (i32, i32) {
    %c0_i32 = arith.constant 0 : i32
    return %arg1, %arg0 : i32, i32
  }
  func.func @transform_1(%arg0: i32, %arg1: i32) -> (i32, i32) {
    %c0_i32 = arith.constant 0 : i32
    %c0_i32_0 = arith.constant 0 : i32
    %c0_i32_1 = arith.constant 0 : i32
    return %c0_i32, %c0_i32_0 : i32, i32
  }
  func.func @transform_2(%arg0: i32, %arg1: i32) -> (i32, i32) {
    %c0_i32 = arith.constant 0 : i32
    %c0_i32_0 = arith.constant 0 : i32
    %c0_i32_1 = arith.constant 0 : i32
    return %c0_i32, %c0_i32_0 : i32, i32
  }
  func.func @transform_3(%arg0: i32, %arg1: i32) -> (i32, i32) {
    %c0_i32 = arith.constant 0 : i32
    %c0_i32_0 = arith.constant 0 : i32
    %c0_i32_1 = arith.constant 0 : i32
    return %c0_i32, %c0_i32_0 : i32, i32
  }
  func.func @transform_4(%arg0: i32, %arg1: i32) -> (i32, i32) {
    %c0_i32 = arith.constant 0 : i32
    %c0_i32_0 = arith.constant 0 : i32
    return %c0_i32, %arg0 : i32, i32
  }
}

</mosaic_0001>

<llo_original>
// kernel: tpu_custom_call.1
$region0: #{tpu_custom_call.1}
  #allocation0 [shape = 'u32[]', space=smem, size = 0x4, offset = 0x4, fixed_abs, tag = 'smem constant byte address 0x4 - core index']
  #allocation1 [shape = 'u32[72,128]{1,0:T(1,128)}', space=vmem, size = 0x9000, scoped, tag = 'internal scratch']
  %s0 = inlined_call_operand.vmem [shape: f32[16,8], index: 0, kind: input, shape index: {}]
  %s1 = inlined_call_operand.vmem [shape: f32[128,1], index: 1, kind: input, shape index: {}]
  %s2 = inlined_call_operand.vmem [shape: f32[128,1], index: 2, kind: input, shape index: {}]
  %s3 = inlined_call_operand.vmem [shape: f32[128,128], index: 3, kind: input, shape index: {}]
  %s4 = inlined_call_operand.vmem [shape: f32[128,8], index: 4, kind: output, shape index: {}]
  %s5 = sld [smem:[#allocation0]]
  $region53: #{tpu_custom_call.1} parent=0
    _
  %s7 = ssub.s32 1, %s5
  %s8 = scalar_select 0, %s7, %s5
  loop: start=0, step=1, limit=4
  $region2: #{tpu_custom_call.1} parent=0 // loop_pre_header
    _
  $region3: #{tpu_custom_call.1} parent=0 // loop_header
    %s10 = sphi 0, %s14
    %p11 = scmp.ge.s32.totalorder %s10, 4
    %s17 = sphi 0, %s29
    %s18 = sphi 0, %s25
    %s19 = sphi 0, %s17
    %s20 = sphi 0, %s18
    %s21 = sphi 0, %s19
    %s22 = sphi 0, %s20
    %s34 = sphi 0, %s36
    %s37 = sphi 0, %s34
    %s38 = sphi 0, %s37
    %s54 = sphi 0, %s38
    %s58 = sphi 0, %s58
    %s60 = sphi 0, %s58
    %s61 = sphi 0, %s60
    %s75 = sphi 0, %s61
    %s79 = sphi 0, %s79
    %s81 = sphi 0, %s79
    %s82 = sphi 0, %s81
    %s96 = sphi 0, %s82
    %s100 = sphi 0, %s100
    %s102 = sphi 0, %s100
    %s103 = sphi 0, %s102
    %s117 = sphi 0, %s103
    %s123 = sphi 0, %s125
    %s126 = sphi 0, %s123
    %s127 = sphi 0, %s126
    %s143 = sphi 0, %s127
  $region4: #{tpu_custom_call.1} parent=0 // loop_header_branch
    %13 = sbr.rel (%p11) target = $region8
  $region5: #{tpu_custom_call.1} parent=0 // loop_body
    %s15 = ssub.s32 %s10, 1
    %s16 = ssub.s32 %s10, 2
    %s23 = sadd.s32 1, %s18
    %p24 = scmp.ge.s32.totalorder %s23, 2
    %s25 = scalar_select %p24, 0, %s23
    %s26 = sadd.s32 1, %s17
    %s27 = scalar_select %p24, %s26, %s17
    %p28 = scmp.ge.s32.totalorder %s27, 1
    %s29 = scalar_select %p28, 0, %s27
    %s30 = ssub.s32 %s18, %s25
    %s31 = ssub.s32 %s17, %s29
    %s32 = sor.u32 %s30, %s31
    %p33 = scmp.eq.s32.totalorder %s32, 0
    %s35 = sadd.s32 %s34, 1
    %s36 = scalar_select %p33, %s34, %s35
    %p39 = pneg %p33
    %p40 = scmp.eq.s32.totalorder %s10, 1
    %p41 = por %p39, %p40
    %p42 = scmp.ne.s32.totalorder %s34, %s37
    %p43 = scmp.eq.s32.totalorder %s10, 0
    %p44 = por %p42, %p43
    %p45 = scmp.ne.s32.totalorder %s34, %s37
    %p46 = scmp.eq.s32.totalorder %s15, 1
    %p47 = por %p45, %p46
    %p48 = scmp.ne.s32.totalorder %s37, %s38
    %p49 = scmp.eq.s32.totalorder %s15, 0
    %p50 = por %p48, %p49
    %p51 = scmp.ne.s32.totalorder %s37, %s38
    %p52 = scmp.eq.s32.totalorder %s16, 1
    %p53 = por %p51, %p52
    %p55 = scmp.ne.s32.totalorder %s38, %s54
    %p56 = scmp.eq.s32.totalorder %s16, 0
    %p57 = por %p55, %p56
    %s59 = sadd.s32 %s58, 1
    %p62 = scmp.eq.s32.totalorder %s10, 1
    %p63 = scmp.ne.s32.totalorder %s58, %s60
    %p64 = scmp.eq.s32.totalorder %s10, 0
    %p65 = por %p63, %p64
    %p66 = scmp.ne.s32.totalorder %s58, %s60
    %p67 = scmp.eq.s32.totalorder %s15, 1
    %p68 = por %p66, %p67
    %p69 = scmp.ne.s32.totalorder %s60, %s61
    %p70 = scmp.eq.s32.totalorder %s15, 0
    %p71 = por %p69, %p70
    %p72 = scmp.ne.s32.totalorder %s60, %s61
    %p73 = scmp.eq.s32.totalorder %s16, 1
    %p74 = por %p72, %p73
    %p76 = scmp.ne.s32.totalorder %s61, %s75
    %p77 = scmp.eq.s32.totalorder %s16, 0
    %p78 = por %p76, %p77
    %s80 = sadd.s32 %s79, 1
    %p83 = scmp.eq.s32.totalorder %s10, 1
    %p84 = scmp.ne.s32.totalorder %s79, %s81
    %p85 = scmp.eq.s32.totalorder %s10, 0
    %p86 = por %p84, %p85
    %p87 = scmp.ne.s32.totalorder %s79, %s81
    %p88 = scmp.eq.s32.totalorder %s15, 1
    %p89 = por %p87, %p88
    %p90 = scmp.ne.s32.totalorder %s81, %s82
    %p91 = scmp.eq.s32.totalorder %s15, 0
    %p92 = por %p90, %p91
    %p93 = scmp.ne.s32.totalorder %s81, %s82
    %p94 = scmp.eq.s32.totalorder %s16, 1
    %p95 = por %p93, %p94
    %p97 = scmp.ne.s32.totalorder %s82, %s96
    %p98 = scmp.eq.s32.totalorder %s16, 0
    %p99 = por %p97, %p98
    %s101 = sadd.s32 %s100, 1
    %p104 = scmp.eq.s32.totalorder %s10, 1
    %p105 = scmp.ne.s32.totalorder %s100, %s102
    %p106 = scmp.eq.s32.totalorder %s10, 0
    %p107 = por %p105, %p106
    %p108 = scmp.ne.s32.totalorder %s100, %s102
    %p109 = scmp.eq.s32.totalorder %s15, 1
    %p110 = por %p108, %p109
    %p111 = scmp.ne.s32.totalorder %s102, %s103
    %p112 = scmp.eq.s32.totalorder %s15, 0
    %p113 = por %p111, %p112
    %p114 = scmp.ne.s32.totalorder %s102, %s103
    %p115 = scmp.eq.s32.totalorder %s16, 1
    %p116 = por %p114, %p115
    %p118 = scmp.ne.s32.totalorder %s103, %s117
    %p119 = scmp.eq.s32.totalorder %s16, 0
    %p120 = por %p118, %p119
    %s121 = ssub.s32 %s17, %s29
    %p122 = scmp.eq.s32.totalorder %s121, 0
    %s124 = sadd.s32 %s123, 1
    %s125 = scalar_select %p122, %s123, %s124
    %p128 = pneg %p122
    %p129 = scmp.eq.s32.totalorder %s10, 1
    %p130 = por %p128, %p129
    %p131 = scmp.ne.s32.totalorder %s123, %s126
    %p132 = scmp.eq.s32.totalorder %s10, 0
    %p133 = por %p131, %p132
    %p134 = scmp.ne.s32.totalorder %s123, %s126
    %p135 = scmp.eq.s32.totalorder %s15, 1
    %p136 = por %p134, %p135
    %p137 = scmp.ne.s32.totalorder %s126, %s127
    %p138 = scmp.eq.s32.totalorder %s15, 0
    %p139 = por %p137, %p138
    %p140 = scmp.ne.s32.totalorder %s126, %s127
    %p141 = scmp.eq.s32.totalorder %s16, 1
    %p142 = por %p140, %p141
    %p144 = scmp.ne.s32.totalorder %s127, %s143
    %p145 = scmp.eq.s32.totalorder %s16, 0
    %p146 = por %p144, %p145
    %p147 = scmp.le.s32.totalorder 1, %s10
    %p148 = scmp.lt.s32.totalorder %s10, 3
    %p149 = pnand %p147, %p148
    %p150 = pneg %p149
    // Predicated region
    $region9: #{tpu_custom_call.1} parent=5 // pred_check
      _
    $region10: #{tpu_custom_call.1} parent=5 // pred_check_branch
      %152 = sbr.rel (%p149) target = $region12
    $region11: #{tpu_custom_call.1} parent=5 // pred_region
      %s153 = ssub.s32 %s10, 1
      // Predicated region
      $region13: #{tpu_custom_call.1} parent=11 // pred_check
        %p154 = pneg %p71
      $region14: #{tpu_custom_call.1} parent=11 // pred_check_branch
        %156 = sbr.rel (%p154) target = $region16
      $region15: #{tpu_custom_call.1} parent=11 // pred_region
        _
      $region16: #{tpu_custom_call.1} parent=11 // pred_fallthru
        _
      // Predicated region
      $region17: #{tpu_custom_call.1} parent=11 // pred_check
        %p157 = pneg %p92
      $region18: #{tpu_custom_call.1} parent=11 // pred_check_branch
        %159 = sbr.rel (%p157) target = $region20
      $region19: #{tpu_custom_call.1} parent=11 // pred_region
        _
      $region20: #{tpu_custom_call.1} parent=11 // pred_fallthru
        _
      // Predicated region
      $region21: #{tpu_custom_call.1} parent=11 // pred_check
        %p160 = pneg %p113
      $region22: #{tpu_custom_call.1} parent=11 // pred_check_branch
        %162 = sbr.rel (%p160) target = $region24
      $region23: #{tpu_custom_call.1} parent=11 // pred_region
        _
      $region24: #{tpu_custom_call.1} parent=11 // pred_fallthru
        _
    $region12: #{tpu_custom_call.1} parent=5 // pred_fallthru
      _
    %p163 = scmp.lt.s32.totalorder %s10, 2
    // Predicated region
    $region25: #{tpu_custom_call.1} parent=5 // pred_check
      %p164 = pneg %p163
    $region26: #{tpu_custom_call.1} parent=5 // pred_check_branch
      %166 = sbr.rel (%p164) target = $region28
    $region27: #{tpu_custom_call.1} parent=5 // pred_region
      // Predicated region
      $region29: #{tpu_custom_call.1} parent=27 // pred_check
        %p167 = pneg %p44
      $region30: #{tpu_custom_call.1} parent=27 // pred_check_branch
        %169 = sbr.rel (%p167) target = $region32
      $region31: #{tpu_custom_call.1} parent=27 // pred_region
        %p170 = scmp.lt.s32.totalorder %s18, 1
        %s171 = scalar_select %p170, %s18, 1
        %p172 = scmp.lt.s32.totalorder %s17, 0
        %s173 = scalar_select %p172, %s17, 0
        %s174 = sadd.s32 %s173, %s171
        %s175 = smul.addr %s174, 8
        %s176 = scalar_lea.vmem %s0, %s175
      $region32: #{tpu_custom_call.1} parent=27 // pred_fallthru
        _
    $region28: #{tpu_custom_call.1} parent=5 // pred_fallthru
      _
    %p177 = scmp.le.s32.totalorder 1, %s10
    %p178 = scmp.lt.s32.totalorder %s10, 3
    %p179 = pnand %p177, %p178
    %p180 = pneg %p179
    // Predicated region
    $region33: #{tpu_custom_call.1} parent=5 // pred_check
      _
    $region34: #{tpu_custom_call.1} parent=5 // pred_check_branch
      %182 = sbr.rel (%p179) target = $region36
    $region35: #{tpu_custom_call.1} parent=5 // pred_region
      %s183 = ssub.s32 %s10, 1
      %p184 = scmp.lt.s32.totalorder %s20, 1
      %s185 = scalar_select %p184, %s20, 1
      %p186 = scmp.lt.s32.totalorder %s19, 0
      %s187 = scalar_select %p186, %s19, 0
      %s188 = sadd.s32 %s187, %s185
      %s189 = smul.addr %s188, 8
      %s190 = scalar_lea.vmem %s0, %s189
      %p191 = pneg %p50
      %p192 = pneg %p47
      %p193 = pneg %p71
      %p194 = pneg %p68
      %p195 = pneg %p92
      %p196 = pneg %p89
      %p197 = pneg %p113
      %p198 = pneg %p110
      %p199 = pneg %p139
      %p200 = pneg %p136
      %p201 = scmp.lt.s32.totalorder %s19, 0
      %s202 = scalar_select %p201, %s19, 0
      %s203 = smul.addr %s202, 8
      %s204 = scalar_lea.vmem %s4, %s203
      %p205 = scmp.lt.s32.totalorder %s20, 1
      %s206 = scalar_select %p205, %s20, 1
      %p207 = scmp.lt.s32.totalorder %s19, 0
      %s208 = scalar_select %p207, %s19, 0
      %s209 = sadd.s32 %s208, %s206
      %s210 = smul.addr %s209, 8
      %s211 = scalar_lea.vmem %s0, %s210
      %p212 = scmp.lt.s32.totalorder %s19, 0
      %s213 = scalar_select %p212, %s19, 0
      %s214 = smul.addr %s213, 8
      %s215 = scalar_lea.vmem %s4, %s214
      %p216 = scmp.eq.s32.totalorder %s20, 0
      // Predicated region
      $region37: #{tpu_custom_call.1} parent=35 // pred_check
        %p217 = pneg %p216
      $region38: #{tpu_custom_call.1} parent=35 // pred_check_branch
        %219 = sbr.rel (%p217) target = $region40
      $region39: #{tpu_custom_call.1} parent=35 // pred_region
        %vm220 = vcmask 64512
        %221 = vst.msk [vmem:[%s215] sm:$0xff] %vm220, 0.0
        %222 = vst.msk [vmem:[%s215 + $0x8] sm:$0xff] %vm220, 0.0
        %223 = vst.msk [vmem:[%s215 + $0x10] sm:$0xff] %vm220, 0.0
        %224 = vst.msk [vmem:[%s215 + $0x18] sm:$0xff] %vm220, 0.0
        %225 = vst.msk [vmem:[%s215 + $0x20] sm:$0xff] %vm220, 0.0
        %226 = vst.msk [vmem:[%s215 + $0x28] sm:$0xff] %vm220, 0.0
        %227 = vst.msk [vmem:[%s215 + $0x30] sm:$0xff] %vm220, 0.0
        %228 = vst.msk [vmem:[%s215 + $0x38] sm:$0xff] %vm220, 0.0
        %229 = vst.msk [vmem:[%s215 + $0x40] sm:$0xff] %vm220, 0.0
        %230 = vst.msk [vmem:[%s215 + $0x48] sm:$0xff] %vm220, 0.0
        %231 = vst.msk [vmem:[%s215 + $0x50] sm:$0xff] %vm220, 0.0
        %232 = vst.msk [vmem:[%s215 + $0x58] sm:$0xff] %vm220, 0.0
        %233 = vst.msk [vmem:[%s215 + $0x60] sm:$0xff] %vm220, 0.0
        %234 = vst.msk [vmem:[%s215 + $0x68] sm:$0xff] %vm220, 0.0
        %235 = vst.msk [vmem:[%s215 + $0x70] sm:$0xff] %vm220, 0.0
        %236 = vst.msk [vmem:[%s215 + $0x78] sm:$0xff] %vm220, 0.0
      $region40: #{tpu_custom_call.1} parent=35 // pred_fallthru
        _
      %v237 = vld [vmem:[%s3] sm:$0xff]
      %v238 = vld [vmem:[%s3 + $0x8] sm:$0xff]
      %v239 = vld [vmem:[%s3 + $0x10] sm:$0xff]
      %v240 = vld [vmem:[%s3 + $0x18] sm:$0xff]
      %v241 = vld [vmem:[%s3 + $0x20] sm:$0xff]
      %v242 = vld [vmem:[%s3 + $0x28] sm:$0xff]
      %v243 = vld [vmem:[%s3 + $0x30] sm:$0xff]
      %v244 = vld [vmem:[%s3 + $0x38] sm:$0xff]
      %v245 = vld [vmem:[%s3 + $0x40] sm:$0xff]
      %v246 = vld [vmem:[%s3 + $0x48] sm:$0xff]
      %v247 = vld [vmem:[%s3 + $0x50] sm:$0xff]
      %v248 = vld [vmem:[%s3 + $0x58] sm:$0xff]
      %v249 = vld [vmem:[%s3 + $0x60] sm:$0xff]
      %v250 = vld [vmem:[%s3 + $0x68] sm:$0xff]
      %v251 = vld [vmem:[%s3 + $0x70] sm:$0xff]
      %v252 = vld [vmem:[%s3 + $0x78] sm:$0xff]
      %v253 = vld [vmem:[%s1] sm:$0xff]
      %v254 = vld [vmem:[%s1 + $0x8] sm:$0xff]
      %v255 = vld [vmem:[%s1 + $0x10] sm:$0xff]
      %v256 = vld [vmem:[%s1 + $0x18] sm:$0xff]
      %v257 = vld [vmem:[%s1 + $0x20] sm:$0xff]
      %v258 = vld [vmem:[%s1 + $0x28] sm:$0xff]
      %v259 = vld [vmem:[%s1 + $0x30] sm:$0xff]
      %v260 = vld [vmem:[%s1 + $0x38] sm:$0xff]
      %v261 = vld [vmem:[%s1 + $0x40] sm:$0xff]
      %v262 = vld [vmem:[%s1 + $0x48] sm:$0xff]
      %v263 = vld [vmem:[%s1 + $0x50] sm:$0xff]
      %v264 = vld [vmem:[%s1 + $0x58] sm:$0xff]
      %v265 = vld [vmem:[%s1 + $0x60] sm:$0xff]
      %v266 = vld [vmem:[%s1 + $0x68] sm:$0xff]
      %v267 = vld [vmem:[%s1 + $0x70] sm:$0xff]
      %v268 = vld [vmem:[%s1 + $0x78] sm:$0xff]
      %v269 = vld [vmem:[%s2] sm:$0xff]
      %v270 = vld [vmem:[%s2 + $0x8] sm:$0xff]
      %v271 = vld [vmem:[%s2 + $0x10] sm:$0xff]
      %v272 = vld [vmem:[%s2 + $0x18] sm:$0xff]
      %v273 = vld [vmem:[%s2 + $0x20] sm:$0xff]
      %v274 = vld [vmem:[%s2 + $0x28] sm:$0xff]
      %v275 = vld [vmem:[%s2 + $0x30] sm:$0xff]
      %v276 = vld [vmem:[%s2 + $0x38] sm:$0xff]
      %v277 = vld [vmem:[%s2 + $0x40] sm:$0xff]
      %v278 = vld [vmem:[%s2 + $0x48] sm:$0xff]
      %v279 = vld [vmem:[%s2 + $0x50] sm:$0xff]
      %v280 = vld [vmem:[%s2 + $0x58] sm:$0xff]
      %v281 = vld [vmem:[%s2 + $0x60] sm:$0xff]
      %v282 = vld [vmem:[%s2 + $0x68] sm:$0xff]
      %v283 = vld [vmem:[%s2 + $0x70] sm:$0xff]
      %v284 = vld [vmem:[%s2 + $0x78] sm:$0xff]
      %s285 = smul.u32 %s20, 8
      %v286 = vld [vmem:[%s215] sm:$0xff]
      %v287 = vld [vmem:[%s215 + $0x8] sm:$0xff]
      %v288 = vld [vmem:[%s215 + $0x10] sm:$0xff]
      %v289 = vld [vmem:[%s215 + $0x18] sm:$0xff]
      %v290 = vld [vmem:[%s215 + $0x20] sm:$0xff]
      %v291 = vld [vmem:[%s215 + $0x28] sm:$0xff]
      %v292 = vld [vmem:[%s215 + $0x30] sm:$0xff]
      %v293 = vld [vmem:[%s215 + $0x38] sm:$0xff]
      %v294 = vld [vmem:[%s215 + $0x40] sm:$0xff]
      %v295 = vld [vmem:[%s215 + $0x48] sm:$0xff]
      %v296 = vld [vmem:[%s215 + $0x50] sm:$0xff]
      %v297 = vld [vmem:[%s215 + $0x58] sm:$0xff]
      %v298 = vld [vmem:[%s215 + $0x60] sm:$0xff]
      %v299 = vld [vmem:[%s215 + $0x68] sm:$0xff]
      %v300 = vld [vmem:[%s215 + $0x70] sm:$0xff]
      %v301 = vld [vmem:[%s215 + $0x78] sm:$0xff]
      %v302 = vld [vmem:[%s211] sm:$0x1]
      %304 = vset.pattern.permute.xlu0 0
      %305 = vperm.xlu0 %304, %v253
      %v306 = vpop.permute.xlu0 %305
      %309 = vset.pattern.permute.xlu0 0
      %310 = vperm.xlu0 %309, %v254
      %v311 = vpop.permute.xlu0 %310
      %314 = vset.pattern.permute.xlu0 0
      %315 = vperm.xlu0 %314, %v255
      %v316 = vpop.permute.xlu0 %315
      %319 = vset.pattern.permute.xlu0 0
      %320 = vperm.xlu0 %319, %v256
      %v321 = vpop.permute.xlu0 %320
      %324 = vset.pattern.permute.xlu0 0
      %325 = vperm.xlu0 %324, %v257
      %v326 = vpop.permute.xlu0 %325
      %329 = vset.pattern.permute.xlu0 0
      %330 = vperm.xlu0 %329, %v258
      %v331 = vpop.permute.xlu0 %330
      %334 = vset.pattern.permute.xlu0 0
      %335 = vperm.xlu0 %334, %v259
      %v336 = vpop.permute.xlu0 %335
      %339 = vset.pattern.permute.xlu0 0
      %340 = vperm.xlu0 %339, %v260
      %v341 = vpop.permute.xlu0 %340
      %344 = vset.pattern.permute.xlu0 0
      %345 = vperm.xlu0 %344, %v261
      %v346 = vpop.permute.xlu0 %345
      %349 = vset.pattern.permute.xlu0 0
      %350 = vperm.xlu0 %349, %v262
      %v351 = vpop.permute.xlu0 %350
      %354 = vset.pattern.permute.xlu0 0
      %355 = vperm.xlu0 %354, %v263
      %v356 = vpop.permute.xlu0 %355
      %359 = vset.pattern.permute.xlu0 0
      %360 = vperm.xlu0 %359, %v264
      %v361 = vpop.permute.xlu0 %360
      %364 = vset.pattern.permute.xlu0 0
      %365 = vperm.xlu0 %364, %v265
      %v366 = vpop.permute.xlu0 %365
      %369 = vset.pattern.permute.xlu0 0
      %370 = vperm.xlu0 %369, %v266
      %v371 = vpop.permute.xlu0 %370
      %374 = vset.pattern.permute.xlu0 0
      %375 = vperm.xlu0 %374, %v267
      %v376 = vpop.permute.xlu0 %375
      %379 = vset.pattern.permute.xlu0 0
      %380 = vperm.xlu0 %379, %v268
      %v381 = vpop.permute.xlu0 %380
      %v383 = vperm.slane %v302, 0
      %v384 = vmul.f32 %v306, %v383
      %v385 = vmul.f32 %v311, %v383
      %v386 = vmul.f32 %v316, %v383
      %v387 = vmul.f32 %v321, %v383
      %v388 = vmul.f32 %v326, %v383
      %v389 = vmul.f32 %v331, %v383
      %v390 = vmul.f32 %v336, %v383
      %v391 = vmul.f32 %v341, %v383
      %v392 = vmul.f32 %v346, %v383
      %v393 = vmul.f32 %v351, %v383
      %v394 = vmul.f32 %v356, %v383
      %v395 = vmul.f32 %v361, %v383
      %v396 = vmul.f32 %v366, %v383
      %v397 = vmul.f32 %v371, %v383
      %v398 = vmul.f32 %v376, %v383
      %v399 = vmul.f32 %v381, %v383
      %401 = vset.pattern.permute.xlu0 0
      %402 = vperm.xlu0 %401, %v269
      %v403 = vpop.permute.xlu0 %402
      %406 = vset.pattern.permute.xlu0 0
      %407 = vperm.xlu0 %406, %v270
      %v408 = vpop.permute.xlu0 %407
      %411 = vset.pattern.permute.xlu0 0
      %412 = vperm.xlu0 %411, %v271
      %v413 = vpop.permute.xlu0 %412
      %416 = vset.pattern.permute.xlu0 0
      %417 = vperm.xlu0 %416, %v272
      %v418 = vpop.permute.xlu0 %417
      %421 = vset.pattern.permute.xlu0 0
      %422 = vperm.xlu0 %421, %v273
      %v423 = vpop.permute.xlu0 %422
      %426 = vset.pattern.permute.xlu0 0
      %427 = vperm.xlu0 %426, %v274
      %v428 = vpop.permute.xlu0 %427
      %431 = vset.pattern.permute.xlu0 0
      %432 = vperm.xlu0 %431, %v275
      %v433 = vpop.permute.xlu0 %432
      %436 = vset.pattern.permute.xlu0 0
      %437 = vperm.xlu0 %436, %v276
      %v438 = vpop.permute.xlu0 %437
      %441 = vset.pattern.permute.xlu0 0
      %442 = vperm.xlu0 %441, %v277
      %v443 = vpop.permute.xlu0 %442
      %446 = vset.pattern.permute.xlu0 0
      %447 = vperm.xlu0 %446, %v278
      %v448 = vpop.permute.xlu0 %447
      %451 = vset.pattern.permute.xlu0 0
      %452 = vperm.xlu0 %451, %v279
      %v453 = vpop.permute.xlu0 %452
      %456 = vset.pattern.permute.xlu0 0
      %457 = vperm.xlu0 %456, %v280
      %v458 = vpop.permute.xlu0 %457
      %461 = vset.pattern.permute.xlu0 0
      %462 = vperm.xlu0 %461, %v281
      %v463 = vpop.permute.xlu0 %462
      %466 = vset.pattern.permute.xlu0 0
      %467 = vperm.xlu0 %466, %v282
      %v468 = vpop.permute.xlu0 %467
      %471 = vset.pattern.permute.xlu0 0
      %472 = vperm.xlu0 %471, %v283
      %v473 = vpop.permute.xlu0 %472
      %476 = vset.pattern.permute.xlu0 0
      %477 = vperm.xlu0 %476, %v284
      %v478 = vpop.permute.xlu0 %477
      %v480 = vadd.f32 %v384, %v403
      %v481 = vadd.f32 %v385, %v408
      %v482 = vadd.f32 %v386, %v413
      %v483 = vadd.f32 %v387, %v418
      %v484 = vadd.f32 %v388, %v423
      %v485 = vadd.f32 %v389, %v428
      %v486 = vadd.f32 %v390, %v433
      %v487 = vadd.f32 %v391, %v438
      %v488 = vadd.f32 %v392, %v443
      %v489 = vadd.f32 %v393, %v448
      %v490 = vadd.f32 %v394, %v453
      %v491 = vadd.f32 %v395, %v458
      %v492 = vadd.f32 %v396, %v463
      %v493 = vadd.f32 %v397, %v468
      %v494 = vadd.f32 %v398, %v473
      %v495 = vadd.f32 %v399, %v478
      %496 = vmatpush.msra.mxu0 %v301
      %497 = vmatpush.msra.mxu0 %v300
      %498 = vmatpush.msra.mxu0 %v299
      %499 = vmatpush.msra.mxu0 %v298
      %500 = vmatpush.msra.mxu0 %v297
      %501 = vmatpush.msra.mxu0 %v296
      %502 = vmatpush.msra.mxu0 %v295
      %503 = vmatpush.msra.mxu0 %v294
      %504 = vmatpush.msra.mxu0 %v293
      %505 = vmatpush.msra.mxu0 %v292
      %506 = vmatpush.msra.mxu0 %v291
      %507 = vmatpush.msra.mxu0 %v290
      %508 = vmatpush.msra.mxu0 %v289
      %509 = vmatpush.msra.mxu0 %v288
      %510 = vmatpush.msra.mxu0 %v287
      %511 = vmatpush.msra.mxu0 %v286
      %512 = vmatmul.f32.gmra.mxu0 %v237
      %v513 = vpop.f32.mrf.mxu0
      %v514 = vadd.f32 0.0, %v513
      %515 = vmatmul.f32.gmra.mxu0 %v238
      %v516 = vpop.f32.mrf.mxu0
      %v517 = vadd.f32 0.0, %v516
      %518 = vmatmul.f32.gmra.mxu0 %v239
      %v519 = vpop.f32.mrf.mxu0
      %v520 = vadd.f32 0.0, %v519
      %521 = vmatmul.f32.gmra.mxu0 %v240
      %v522 = vpop.f32.mrf.mxu0
      %v523 = vadd.f32 0.0, %v522
      %524 = vmatmul.f32.gmra.mxu0 %v241
      %v525 = vpop.f32.mrf.mxu0
      %v526 = vadd.f32 0.0, %v525
      %527 = vmatmul.f32.gmra.mxu0 %v242
      %v528 = vpop.f32.mrf.mxu0
      %v529 = vadd.f32 0.0, %v528
      %530 = vmatmul.f32.gmra.mxu0 %v243
      %v531 = vpop.f32.mrf.mxu0
      %v532 = vadd.f32 0.0, %v531
      %533 = vmatmul.f32.gmra.mxu0 %v244
      %v534 = vpop.f32.mrf.mxu0
      %v535 = vadd.f32 0.0, %v534
      %536 = vmatmul.f32.gmra.mxu0 %v245
      %v537 = vpop.f32.mrf.mxu0
      %v538 = vadd.f32 0.0, %v537
      %539 = vmatmul.f32.gmra.mxu0 %v246
      %v540 = vpop.f32.mrf.mxu0
      %v541 = vadd.f32 0.0, %v540
      %542 = vmatmul.f32.gmra.mxu0 %v247
      %v543 = vpop.f32.mrf.mxu0
      %v544 = vadd.f32 0.0, %v543
      %545 = vmatmul.f32.gmra.mxu0 %v248
      %v546 = vpop.f32.mrf.mxu0
      %v547 = vadd.f32 0.0, %v546
      %548 = vmatmul.f32.gmra.mxu0 %v249
      %v549 = vpop.f32.mrf.mxu0
      %v550 = vadd.f32 0.0, %v549
      %551 = vmatmul.f32.gmra.mxu0 %v250
      %v552 = vpop.f32.mrf.mxu0
      %v553 = vadd.f32 0.0, %v552
      %554 = vmatmul.f32.gmra.mxu0 %v251
      %v555 = vpop.f32.mrf.mxu0
      %v556 = vadd.f32 0.0, %v555
      %557 = vmatmul.f32.gmra.mxu0 %v252
      %v558 = vpop.f32.mrf.mxu0
      %v559 = vadd.f32 0.0, %v558
      %560 = vdwg.mxu0
      %v561 = vadd.f32 %v480, %v514
      %v562 = vadd.f32 %v481, %v517
      %v563 = vadd.f32 %v482, %v520
      %v564 = vadd.f32 %v483, %v523
      %v565 = vadd.f32 %v484, %v526
      %v566 = vadd.f32 %v485, %v529
      %v567 = vadd.f32 %v486, %v532
      %v568 = vadd.f32 %v487, %v535
      %v569 = vadd.f32 %v488, %v538
      %v570 = vadd.f32 %v489, %v541
      %v571 = vadd.f32 %v490, %v544
      %v572 = vadd.f32 %v491, %v547
      %v573 = vadd.f32 %v492, %v550
      %v574 = vadd.f32 %v493, %v553
      %v575 = vadd.f32 %v494, %v556
      %v576 = vadd.f32 %v495, %v559
      %v577 = vtanh.pop %v561
      %v578 = vtanh.pop %v562
      %v579 = vtanh.pop %v563
      %v580 = vtanh.pop %v564
      %v581 = vtanh.pop %v565
      %v582 = vtanh.pop %v566
      %v583 = vtanh.pop %v567
      %v584 = vtanh.pop %v568
      %v585 = vtanh.pop %v569
      %v586 = vtanh.pop %v570
      %v587 = vtanh.pop %v571
      %v588 = vtanh.pop %v572
      %v589 = vtanh.pop %v573
      %v590 = vtanh.pop %v574
      %v591 = vtanh.pop %v575
      %v592 = vtanh.pop %v576
      %p593 = scmp.lt.s32.totalorder %s285, 12
      %s594 = scalar_select %p593, 1, 0
      %v595 = vstv %s594
      %vm596 = vcmp.eq.s32.totalorder %v595, 1
      %v597 = vsel %vm596, %v577, %v286
      %v598 = vsel %vm596, %v578, %v287
      %v599 = vsel %vm596, %v579, %v288
      %v600 = vsel %vm596, %v580, %v289
      %v601 = vsel %vm596, %v581, %v290
      %v602 = vsel %vm596, %v582, %v291
      %v603 = vsel %vm596, %v583, %v292
      %v604 = vsel %vm596, %v584, %v293
      %v605 = vsel %vm596, %v585, %v294
      %v606 = vsel %vm596, %v586, %v295
      %v607 = vsel %vm596, %v587, %v296
      %v608 = vsel %vm596, %v588, %v297
      %v609 = vsel %vm596, %v589, %v298
      %v610 = vsel %vm596, %v590, %v299
      %v611 = vsel %vm596, %v591, %v300
      %v612 = vsel %vm596, %v592, %v301
      %v613 = vld [vmem:[%s211 + $0x1] sm:$0x1]
      %v614 = vperm.slane %v613, 0
      %v615 = vmul.f32 %v306, %v614
      %v616 = vmul.f32 %v311, %v614
      %v617 = vmul.f32 %v316, %v614
      %v618 = vmul.f32 %v321, %v614
      %v619 = vmul.f32 %v326, %v614
      %v620 = vmul.f32 %v331, %v614
      %v621 = vmul.f32 %v336, %v614
      %v622 = vmul.f32 %v341, %v614
      %v623 = vmul.f32 %v346, %v614
      %v624 = vmul.f32 %v351, %v614
      %v625 = vmul.f32 %v356, %v614
      %v626 = vmul.f32 %v361, %v614
      %v627 = vmul.f32 %v366, %v614
      %v628 = vmul.f32 %v371, %v614
      %v629 = vmul.f32 %v376, %v614
      %v630 = vmul.f32 %v381, %v614
      %v631 = vadd.f32 %v615, %v403
      %v632 = vadd.f32 %v616, %v408
      %v633 = vadd.f32 %v617, %v413
      %v634 = vadd.f32 %v618, %v418
      %v635 = vadd.f32 %v619, %v423
      %v636 = vadd.f32 %v620, %v428
      %v637 = vadd.f32 %v621, %v433
      %v638 = vadd.f32 %v622, %v438
      %v639 = vadd.f32 %v623, %v443
      %v640 = vadd.f32 %v624, %v448
      %v641 = vadd.f32 %v625, %v453
      %v642 = vadd.f32 %v626, %v458
      %v643 = vadd.f32 %v627, %v463
      %v644 = vadd.f32 %v628, %v468
      %v645 = vadd.f32 %v629, %v473
      %v646 = vadd.f32 %v630, %v478
      %647 = vmatpush.msra.mxu0 %v612
      %648 = vmatpush.msra.mxu0 %v611
      %649 = vmatpush.msra.mxu0 %v610
      %650 = vmatpush.msra.mxu0 %v609
      %651 = vmatpush.msra.mxu0 %v608
      %652 = vmatpush.msra.mxu0 %v607
      %653 = vmatpush.msra.mxu0 %v606
      %654 = vmatpush.msra.mxu0 %v605
      %655 = vmatpush.msra.mxu0 %v604
      %656 = vmatpush.msra.mxu0 %v603
      %657 = vmatpush.msra.mxu0 %v602
      %658 = vmatpush.msra.mxu0 %v601
      %659 = vmatpush.msra.mxu0 %v600
      %660 = vmatpush.msra.mxu0 %v599
      %661 = vmatpush.msra.mxu0 %v598
      %662 = vmatpush.msra.mxu0 %v597
      %663 = vmatmul.f32.gmra.mxu0 %v237
      %v664 = vpop.f32.mrf.mxu0
      %v665 = vadd.f32 0.0, %v664
      %666 = vmatmul.f32.gmra.mxu0 %v238
      %v667 = vpop.f32.mrf.mxu0
      %v668 = vadd.f32 0.0, %v667
      %669 = vmatmul.f32.gmra.mxu0 %v239
      %v670 = vpop.f32.mrf.mxu0
      %v671 = vadd.f32 0.0, %v670
      %672 = vmatmul.f32.gmra.mxu0 %v240
      %v673 = vpop.f32.mrf.mxu0
      %v674 = vadd.f32 0.0, %v673
      %675 = vmatmul.f32.gmra.mxu0 %v241
      %v676 = vpop.f32.mrf.mxu0
      %v677 = vadd.f32 0.0, %v676
      %678 = vmatmul.f32.gmra.mxu0 %v242
      %v679 = vpop.f32.mrf.mxu0
      %v680 = vadd.f32 0.0, %v679
      %681 = vmatmul.f32.gmra.mxu0 %v243
      %v682 = vpop.f32.mrf.mxu0
      %v683 = vadd.f32 0.0, %v682
      %684 = vmatmul.f32.gmra.mxu0 %v244
      %v685 = vpop.f32.mrf.mxu0
      %v686 = vadd.f32 0.0, %v685
      %687 = vmatmul.f32.gmra.mxu0 %v245
      %v688 = vpop.f32.mrf.mxu0
      %v689 = vadd.f32 0.0, %v688
      %690 = vmatmul.f32.gmra.mxu0 %v246
      %v691 = vpop.f32.mrf.mxu0
      %v692 = vadd.f32 0.0, %v691
      %693 = vmatmul.f32.gmra.mxu0 %v247
      %v694 = vpop.f32.mrf.mxu0
      %v695 = vadd.f32 0.0, %v694
      %696 = vmatmul.f32.gmra.mxu0 %v248
      %v697 = vpop.f32.mrf.mxu0
      %v698 = vadd.f32 0.0, %v697
      %699 = vmatmul.f32.gmra.mxu0 %v249
      %v700 = vpop.f32.mrf.mxu0
      %v701 = vadd.f32 0.0, %v700
      %702 = vmatmul.f32.gmra.mxu0 %v250
      %v703 = vpop.f32.mrf.mxu0
      %v704 = vadd.f32 0.0, %v703
      %705 = vmatmul.f32.gmra.mxu0 %v251
      %v706 = vpop.f32.mrf.mxu0
      %v707 = vadd.f32 0.0, %v706
      %708 = vmatmul.f32.gmra.mxu0 %v252
      %v709 = vpop.f32.mrf.mxu0
      %v710 = vadd.f32 0.0, %v709
      %711 = vdwg.mxu0
      %v712 = vadd.f32 %v631, %v665
      %v713 = vadd.f32 %v632, %v668
      %v714 = vadd.f32 %v633, %v671
      %v715 = vadd.f32 %v634, %v674
      %v716 = vadd.f32 %v635, %v677
      %v717 = vadd.f32 %v636, %v680
      %v718 = vadd.f32 %v637, %v683
      %v719 = vadd.f32 %v638, %v686
      %v720 = vadd.f32 %v639, %v689
      %v721 = vadd.f32 %v640, %v692
      %v722 = vadd.f32 %v641, %v695
      %v723 = vadd.f32 %v642, %v698
      %v724 = vadd.f32 %v643, %v701
      %v725 = vadd.f32 %v644, %v704
      %v726 = vadd.f32 %v645, %v707
      %v727 = vadd.f32 %v646, %v710
      %v728 = vtanh.pop %v712
      %v729 = vtanh.pop %v713
      %v730 = vtanh.pop %v714
      %v731 = vtanh.pop %v715
      %v732 = vtanh.pop %v716
      %v733 = vtanh.pop %v717
      %v734 = vtanh.pop %v718
      %v735 = vtanh.pop %v719
      %v736 = vtanh.pop %v720
      %v737 = vtanh.pop %v721
      %v738 = vtanh.pop %v722
      %v739 = vtanh.pop %v723
      %v740 = vtanh.pop %v724
      %v741 = vtanh.pop %v725
      %v742 = vtanh.pop %v726
      %v743 = vtanh.pop %v727
      %s744 = sadd.s32 %s285, 1
      %p745 = scmp.lt.s32.totalorder %s744, 12
      %s746 = scalar_select %p745, 1, 0
      %v747 = vstv %s746
      %vm748 = vcmp.eq.s32.totalorder %v747, 1
      %v749 = vsel %vm748, %v728, %v597
      %v750 = vsel %vm748, %v729, %v598
      %v751 = vsel %vm748, %v730, %v599
      %v752 = vsel %vm748, %v731, %v600
      %v753 = vsel %vm748, %v732, %v601
      %v754 = vsel %vm748, %v733, %v602
      %v755 = vsel %vm748, %v734, %v603
      %v756 = vsel %vm748, %v735, %v604
      %v757 = vsel %vm748, %v736, %v605
      %v758 = vsel %vm748, %v737, %v606
      %v759 = vsel %vm748, %v738, %v607
      %v760 = vsel %vm748, %v739, %v608
      %v761 = vsel %vm748, %v740, %v609
      %v762 = vsel %vm748, %v741, %v610
      %v763 = vsel %vm748, %v742, %v611
      %v764 = vsel %vm748, %v743, %v612
      %v765 = vld [vmem:[%s211 + $0x2] sm:$0x1]
      %v766 = vperm.slane %v765, 0
      %v767 = vmul.f32 %v306, %v766
      %v768 = vmul.f32 %v311, %v766
      %v769 = vmul.f32 %v316, %v766
      %v770 = vmul.f32 %v321, %v766
      %v771 = vmul.f32 %v326, %v766
      %v772 = vmul.f32 %v331, %v766
      %v773 = vmul.f32 %v336, %v766
      %v774 = vmul.f32 %v341, %v766
      %v775 = vmul.f32 %v346, %v766
      %v776 = vmul.f32 %v351, %v766
      %v777 = vmul.f32 %v356, %v766
      %v778 = vmul.f32 %v361, %v766
      %v779 = vmul.f32 %v366, %v766
      %v780 = vmul.f32 %v371, %v766
      %v781 = vmul.f32 %v376, %v766
      %v782 = vmul.f32 %v381, %v766
      %v783 = vadd.f32 %v767, %v403
      %v784 = vadd.f32 %v768, %v408
      %v785 = vadd.f32 %v769, %v413
      %v786 = vadd.f32 %v770, %v418
      %v787 = vadd.f32 %v771, %v423
      %v788 = vadd.f32 %v772, %v428
      %v789 = vadd.f32 %v773, %v433
      %v790 = vadd.f32 %v774, %v438
      %v791 = vadd.f32 %v775, %v443
      %v792 = vadd.f32 %v776, %v448
      %v793 = vadd.f32 %v777, %v453
      %v794 = vadd.f32 %v778, %v458
      %v795 = vadd.f32 %v779, %v463
      %v796 = vadd.f32 %v780, %v468
      %v797 = vadd.f32 %v781, %v473
      %v798 = vadd.f32 %v782, %v478
      %799 = vmatpush.msra.mxu0 %v764
      %800 = vmatpush.msra.mxu0 %v763
      %801 = vmatpush.msra.mxu0 %v762
      %802 = vmatpush.msra.mxu0 %v761
      %803 = vmatpush.msra.mxu0 %v760
      %804 = vmatpush.msra.mxu0 %v759
      %805 = vmatpush.msra.mxu0 %v758
      %806 = vmatpush.msra.mxu0 %v757
      %807 = vmatpush.msra.mxu0 %v756
      %808 = vmatpush.msra.mxu0 %v755
      %809 = vmatpush.msra.mxu0 %v754
      %810 = vmatpush.msra.mxu0 %v753
      %811 = vmatpush.msra.mxu0 %v752
      %812 = vmatpush.msra.mxu0 %v751
      %813 = vmatpush.msra.mxu0 %v750
      %814 = vmatpush.msra.mxu0 %v749
      %815 = vmatmul.f32.gmra.mxu0 %v237
      %v816 = vpop.f32.mrf.mxu0
      %v817 = vadd.f32 0.0, %v816
      %818 = vmatmul.f32.gmra.mxu0 %v238
      %v819 = vpop.f32.mrf.mxu0
      %v820 = vadd.f32 0.0, %v819
      %821 = vmatmul.f32.gmra.mxu0 %v239
      %v822 = vpop.f32.mrf.mxu0
      %v823 = vadd.f32 0.0, %v822
      %824 = vmatmul.f32.gmra.mxu0 %v240
      %v825 = vpop.f32.mrf.mxu0
      %v826 = vadd.f32 0.0, %v825
      %827 = vmatmul.f32.gmra.mxu0 %v241
      %v828 = vpop.f32.mrf.mxu0
      %v829 = vadd.f32 0.0, %v828
      %830 = vmatmul.f32.gmra.mxu0 %v242
      %v831 = vpop.f32.mrf.mxu0
      %v832 = vadd.f32 0.0, %v831
      %833 = vmatmul.f32.gmra.mxu0 %v243
      %v834 = vpop.f32.mrf.mxu0
      %v835 = vadd.f32 0.0, %v834
      %836 = vmatmul.f32.gmra.mxu0 %v244
      %v837 = vpop.f32.mrf.mxu0
      %v838 = vadd.f32 0.0, %v837
      %839 = vmatmul.f32.gmra.mxu0 %v245
      %v840 = vpop.f32.mrf.mxu0
      %v841 = vadd.f32 0.0, %v840
      %842 = vmatmul.f32.gmra.mxu0 %v246
      %v843 = vpop.f32.mrf.mxu0
      %v844 = vadd.f32 0.0, %v843
      %845 = vmatmul.f32.gmra.mxu0 %v247
      %v846 = vpop.f32.mrf.mxu0
      %v847 = vadd.f32 0.0, %v846
      %848 = vmatmul.f32.gmra.mxu0 %v248
      %v849 = vpop.f32.mrf.mxu0
      %v850 = vadd.f32 0.0, %v849
      %851 = vmatmul.f32.gmra.mxu0 %v249
      %v852 = vpop.f32.mrf.mxu0
      %v853 = vadd.f32 0.0, %v852
      %854 = vmatmul.f32.gmra.mxu0 %v250
      %v855 = vpop.f32.mrf.mxu0
      %v856 = vadd.f32 0.0, %v855
      %857 = vmatmul.f32.gmra.mxu0 %v251
      %v858 = vpop.f32.mrf.mxu0
      %v859 = vadd.f32 0.0, %v858
      %860 = vmatmul.f32.gmra.mxu0 %v252
      %v861 = vpop.f32.mrf.mxu0
      %v862 = vadd.f32 0.0, %v861
      %863 = vdwg.mxu0
      %v864 = vadd.f32 %v783, %v817
      %v865 = vadd.f32 %v784, %v820
      %v866 = vadd.f32 %v785, %v823
      %v867 = vadd.f32 %v786, %v826
      %v868 = vadd.f32 %v787, %v829
      %v869 = vadd.f32 %v788, %v832
      %v870 = vadd.f32 %v789, %v835
      %v871 = vadd.f32 %v790, %v838
      %v872 = vadd.f32 %v791, %v841
      %v873 = vadd.f32 %v792, %v844
      %v874 = vadd.f32 %v793, %v847
      %v875 = vadd.f32 %v794, %v850
      %v876 = vadd.f32 %v795, %v853
      %v877 = vadd.f32 %v796, %v856
      %v878 = vadd.f32 %v797, %v859
      %v879 = vadd.f32 %v798, %v862
      %v880 = vtanh.pop %v864
      %v881 = vtanh.pop %v865
      %v882 = vtanh.pop %v866
      %v883 = vtanh.pop %v867
      %v884 = vtanh.pop %v868
      %v885 = vtanh.pop %v869
      %v886 = vtanh.pop %v870
      %v887 = vtanh.pop %v871
      %v888 = vtanh.pop %v872
      %v889 = vtanh.pop %v873
      %v890 = vtanh.pop %v874
      %v891 = vtanh.pop %v875
      %v892 = vtanh.pop %v876
      %v893 = vtanh.pop %v877
      %v894 = vtanh.pop %v878
      %v895 = vtanh.pop %v879
      %s896 = sadd.s32 %s285, 2
      %p897 = scmp.lt.s32.totalorder %s896, 12
      %s898 = scalar_select %p897, 1, 0
      %v899 = vstv %s898
      %vm900 = vcmp.eq.s32.totalorder %v899, 1
      %v901 = vsel %vm900, %v880, %v749
      %v902 = vsel %vm900, %v881, %v750
      %v903 = vsel %vm900, %v882, %v751
      %v904 = vsel %vm900, %v883, %v752
      %v905 = vsel %vm900, %v884, %v753
      %v906 = vsel %vm900, %v885, %v754
      %v907 = vsel %vm900, %v886, %v755
      %v908 = vsel %vm900, %v887, %v756
      %v909 = vsel %vm900, %v888, %v757
      %v910 = vsel %vm900, %v889, %v758
      %v911 = vsel %vm900, %v890, %v759
      %v912 = vsel %vm900, %v891, %v760
      %v913 = vsel %vm900, %v892, %v761
      %v914 = vsel %vm900, %v893, %v762
      %v915 = vsel %vm900, %v894, %v763
      %v916 = vsel %vm900, %v895, %v764
      %v917 = vld [vmem:[%s211 + $0x3] sm:$0x1]
      %v918 = vperm.slane %v917, 0
      %v919 = vmul.f32 %v306, %v918
      %v920 = vmul.f32 %v311, %v918
      %v921 = vmul.f32 %v316, %v918
      %v922 = vmul.f32 %v321, %v918
      %v923 = vmul.f32 %v326, %v918
      %v924 = vmul.f32 %v331, %v918
      %v925 = vmul.f32 %v336, %v918
      %v926 = vmul.f32 %v341, %v918
      %v927 = vmul.f32 %v346, %v918
      %v928 = vmul.f32 %v351, %v918
      %v929 = vmul.f32 %v356, %v918
      %v930 = vmul.f32 %v361, %v918
      %v931 = vmul.f32 %v366, %v918
      %v932 = vmul.f32 %v371, %v918
      %v933 = vmul.f32 %v376, %v918
      %v934 = vmul.f32 %v381, %v918
      %v935 = vadd.f32 %v919, %v403
      %v936 = vadd.f32 %v920, %v408
      %v937 = vadd.f32 %v921, %v413
      %v938 = vadd.f32 %v922, %v418
      %v939 = vadd.f32 %v923, %v423
      %v940 = vadd.f32 %v924, %v428
      %v941 = vadd.f32 %v925, %v433
      %v942 = vadd.f32 %v926, %v438
      %v943 = vadd.f32 %v927, %v443
      %v944 = vadd.f32 %v928, %v448
      %v945 = vadd.f32 %v929, %v453
      %v946 = vadd.f32 %v930, %v458
      %v947 = vadd.f32 %v931, %v463
      %v948 = vadd.f32 %v932, %v468
      %v949 = vadd.f32 %v933, %v473
      %v950 = vadd.f32 %v934, %v478
      %951 = vmatpush.msra.mxu0 %v916
      %952 = vmatpush.msra.mxu0 %v915
      %953 = vmatpush.msra.mxu0 %v914
      %954 = vmatpush.msra.mxu0 %v913
      %955 = vmatpush.msra.mxu0 %v912
      %956 = vmatpush.msra.mxu0 %v911
      %957 = vmatpush.msra.mxu0 %v910
      %958 = vmatpush.msra.mxu0 %v909
      %959 = vmatpush.msra.mxu0 %v908
      %960 = vmatpush.msra.mxu0 %v907
      %961 = vmatpush.msra.mxu0 %v906
      %962 = vmatpush.msra.mxu0 %v905
      %963 = vmatpush.msra.mxu0 %v904
      %964 = vmatpush.msra.mxu0 %v903
      %965 = vmatpush.msra.mxu0 %v902
      %966 = vmatpush.msra.mxu0 %v901
      %967 = vmatmul.f32.gmra.mxu0 %v237
      %v968 = vpop.f32.mrf.mxu0
      %v969 = vadd.f32 0.0, %v968
      %970 = vmatmul.f32.gmra.mxu0 %v238
      %v971 = vpop.f32.mrf.mxu0
      %v972 = vadd.f32 0.0, %v971
      %973 = vmatmul.f32.gmra.mxu0 %v239
      %v974 = vpop.f32.mrf.mxu0
      %v975 = vadd.f32 0.0, %v974
      %976 = vmatmul.f32.gmra.mxu0 %v240
      %v977 = vpop.f32.mrf.mxu0
      %v978 = vadd.f32 0.0, %v977
      %979 = vmatmul.f32.gmra.mxu0 %v241
      %v980 = vpop.f32.mrf.mxu0
      %v981 = vadd.f32 0.0, %v980
      %982 = vmatmul.f32.gmra.mxu0 %v242
      %v983 = vpop.f32.mrf.mxu0
      %v984 = vadd.f32 0.0, %v983
      %985 = vmatmul.f32.gmra.mxu0 %v243
      %v986 = vpop.f32.mrf.mxu0
      %v987 = vadd.f32 0.0, %v986
      %988 = vmatmul.f32.gmra.mxu0 %v244
      %v989 = vpop.f32.mrf.mxu0
      %v990 = vadd.f32 0.0, %v989
      %991 = vmatmul.f32.gmra.mxu0 %v245
      %v992 = vpop.f32.mrf.mxu0
      %v993 = vadd.f32 0.0, %v992
      %994 = vmatmul.f32.gmra.mxu0 %v246
      %v995 = vpop.f32.mrf.mxu0
      %v996 = vadd.f32 0.0, %v995
      %997 = vmatmul.f32.gmra.mxu0 %v247
      %v998 = vpop.f32.mrf.mxu0
      %v999 = vadd.f32 0.0, %v998
      %1000 = vmatmul.f32.gmra.mxu0 %v248
      %v1001 = vpop.f32.mrf.mxu0
      %v1002 = vadd.f32 0.0, %v1001
      %1003 = vmatmul.f32.gmra.mxu0 %v249
      %v1004 = vpop.f32.mrf.mxu0
      %v1005 = vadd.f32 0.0, %v1004
      %1006 = vmatmul.f32.gmra.mxu0 %v250
      %v1007 = vpop.f32.mrf.mxu0
      %v1008 = vadd.f32 0.0, %v1007
      %1009 = vmatmul.f32.gmra.mxu0 %v251
      %v1010 = vpop.f32.mrf.mxu0
      %v1011 = vadd.f32 0.0, %v1010
      %1012 = vmatmul.f32.gmra.mxu0 %v252
      %v1013 = vpop.f32.mrf.mxu0
      %v1014 = vadd.f32 0.0, %v1013
      %1015 = vdwg.mxu0
      %v1016 = vadd.f32 %v935, %v969
      %v1017 = vadd.f32 %v936, %v972
      %v1018 = vadd.f32 %v937, %v975
      %v1019 = vadd.f32 %v938, %v978
      %v1020 = vadd.f32 %v939, %v981
      %v1021 = vadd.f32 %v940, %v984
      %v1022 = vadd.f32 %v941, %v987
      %v1023 = vadd.f32 %v942, %v990
      %v1024 = vadd.f32 %v943, %v993
      %v1025 = vadd.f32 %v944, %v996
      %v1026 = vadd.f32 %v945, %v999
      %v1027 = vadd.f32 %v946, %v1002
      %v1028 = vadd.f32 %v947, %v1005
      %v1029 = vadd.f32 %v948, %v1008
      %v1030 = vadd.f32 %v949, %v1011
      %v1031 = vadd.f32 %v950, %v1014
      %v1032 = vtanh.pop %v1016
      %v1033 = vtanh.pop %v1017
      %v1034 = vtanh.pop %v1018
      %v1035 = vtanh.pop %v1019
      %v1036 = vtanh.pop %v1020
      %v1037 = vtanh.pop %v1021
      %v1038 = vtanh.pop %v1022
      %v1039 = vtanh.pop %v1023
      %v1040 = vtanh.pop %v1024
      %v1041 = vtanh.pop %v1025
      %v1042 = vtanh.pop %v1026
      %v1043 = vtanh.pop %v1027
      %v1044 = vtanh.pop %v1028
      %v1045 = vtanh.pop %v1029
      %v1046 = vtanh.pop %v1030
      %v1047 = vtanh.pop %v1031
      %s1048 = sadd.s32 %s285, 3
      %p1049 = scmp.lt.s32.totalorder %s1048, 12
      %s1050 = scalar_select %p1049, 1, 0
      %v1051 = vstv %s1050
      %vm1052 = vcmp.eq.s32.totalorder %v1051, 1
      %v1053 = vsel %vm1052, %v1032, %v901
      %v1054 = vsel %vm1052, %v1033, %v902
      %v1055 = vsel %vm1052, %v1034, %v903
      %v1056 = vsel %vm1052, %v1035, %v904
      %v1057 = vsel %vm1052, %v1036, %v905
      %v1058 = vsel %vm1052, %v1037, %v906
      %v1059 = vsel %vm1052, %v1038, %v907
      %v1060 = vsel %vm1052, %v1039, %v908
      %v1061 = vsel %vm1052, %v1040, %v909
      %v1062 = vsel %vm1052, %v1041, %v910
      %v1063 = vsel %vm1052, %v1042, %v911
      %v1064 = vsel %vm1052, %v1043, %v912
      %v1065 = vsel %vm1052, %v1044, %v913
      %v1066 = vsel %vm1052, %v1045, %v914
      %v1067 = vsel %vm1052, %v1046, %v915
      %v1068 = vsel %vm1052, %v1047, %v916
      %v1069 = vld [vmem:[%s211 + $0x4] sm:$0x1]
      %v1070 = vperm.slane %v1069, 0
      %v1071 = vmul.f32 %v306, %v1070
      %v1072 = vmul.f32 %v311, %v1070
      %v1073 = vmul.f32 %v316, %v1070
      %v1074 = vmul.f32 %v321, %v1070
      %v1075 = vmul.f32 %v326, %v1070
      %v1076 = vmul.f32 %v331, %v1070
      %v1077 = vmul.f32 %v336, %v1070
      %v1078 = vmul.f32 %v341, %v1070
      %v1079 = vmul.f32 %v346, %v1070
      %v1080 = vmul.f32 %v351, %v1070
      %v1081 = vmul.f32 %v356, %v1070
      %v1082 = vmul.f32 %v361, %v1070
      %v1083 = vmul.f32 %v366, %v1070
      %v1084 = vmul.f32 %v371, %v1070
      %v1085 = vmul.f32 %v376, %v1070
      %v1086 = vmul.f32 %v381, %v1070
      %v1087 = vadd.f32 %v1071, %v403
      %v1088 = vadd.f32 %v1072, %v408
      %v1089 = vadd.f32 %v1073, %v413
      %v1090 = vadd.f32 %v1074, %v418
      %v1091 = vadd.f32 %v1075, %v423
      %v1092 = vadd.f32 %v1076, %v428
      %v1093 = vadd.f32 %v1077, %v433
      %v1094 = vadd.f32 %v1078, %v438
      %v1095 = vadd.f32 %v1079, %v443
      %v1096 = vadd.f32 %v1080, %v448
      %v1097 = vadd.f32 %v1081, %v453
      %v1098 = vadd.f32 %v1082, %v458
      %v1099 = vadd.f32 %v1083, %v463
      %v1100 = vadd.f32 %v1084, %v468
      %v1101 = vadd.f32 %v1085, %v473
      %v1102 = vadd.f32 %v1086, %v478
      %1103 = vmatpush.msra.mxu0 %v1068
      %1104 = vmatpush.msra.mxu0 %v1067
      %1105 = vmatpush.msra.mxu0 %v1066
      %1106 = vmatpush.msra.mxu0 %v1065
      %1107 = vmatpush.msra.mxu0 %v1064
      %1108 = vmatpush.msra.mxu0 %v1063
      %1109 = vmatpush.msra.mxu0 %v1062
      %1110 = vmatpush.msra.mxu0 %v1061
      %1111 = vmatpush.msra.mxu0 %v1060
      %1112 = vmatpush.msra.mxu0 %v1059
      %1113 = vmatpush.msra.mxu0 %v1058
      %1114 = vmatpush.msra.mxu0 %v1057
      %1115 = vmatpush.msra.mxu0 %v1056
      %1116 = vmatpush.msra.mxu0 %v1055
      %1117 = vmatpush.msra.mxu0 %v1054
      %1118 = vmatpush.msra.mxu0 %v1053
      %1119 = vmatmul.f32.gmra.mxu0 %v237
      %v1120 = vpop.f32.mrf.mxu0
      %v1121 = vadd.f32 0.0, %v1120
      %1122 = vmatmul.f32.gmra.mxu0 %v238
      %v1123 = vpop.f32.mrf.mxu0
      %v1124 = vadd.f32 0.0, %v1123
      %1125 = vmatmul.f32.gmra.mxu0 %v239
      %v1126 = vpop.f32.mrf.mxu0
      %v1127 = vadd.f32 0.0, %v1126
      %1128 = vmatmul.f32.gmra.mxu0 %v240
      %v1129 = vpop.f32.mrf.mxu0
      %v1130 = vadd.f32 0.0, %v1129
      %1131 = vmatmul.f32.gmra.mxu0 %v241
      %v1132 = vpop.f32.mrf.mxu0
      %v1133 = vadd.f32 0.0, %v1132
      %1134 = vmatmul.f32.gmra.mxu0 %v242
      %v1135 = vpop.f32.mrf.mxu0
      %v1136 = vadd.f32 0.0, %v1135
      %1137 = vmatmul.f32.gmra.mxu0 %v243
      %v1138 = vpop.f32.mrf.mxu0
      %v1139 = vadd.f32 0.0, %v1138
      %1140 = vmatmul.f32.gmra.mxu0 %v244
      %v1141 = vpop.f32.mrf.mxu0
      %v1142 = vadd.f32 0.0, %v1141
      %1143 = vmatmul.f32.gmra.mxu0 %v245
      %v1144 = vpop.f32.mrf.mxu0
      %v1145 = vadd.f32 0.0, %v1144
      %1146 = vmatmul.f32.gmra.mxu0 %v246
      %v1147 = vpop.f32.mrf.mxu0
      %v1148 = vadd.f32 0.0, %v1147
      %1149 = vmatmul.f32.gmra.mxu0 %v247
      %v1150 = vpop.f32.mrf.mxu0
      %v1151 = vadd.f32 0.0, %v1150
      %1152 = vmatmul.f32.gmra.mxu0 %v248
      %v1153 = vpop.f32.mrf.mxu0
      %v1154 = vadd.f32 0.0, %v1153
      %1155 = vmatmul.f32.gmra.mxu0 %v249
      %v1156 = vpop.f32.mrf.mxu0
      %v1157 = vadd.f32 0.0, %v1156
      %1158 = vmatmul.f32.gmra.mxu0 %v250
      %v1159 = vpop.f32.mrf.mxu0
      %v1160 = vadd.f32 0.0, %v1159
      %1161 = vmatmul.f32.gmra.mxu0 %v251
      %v1162 = vpop.f32.mrf.mxu0
      %v1163 = vadd.f32 0.0, %v1162
      %1164 = vmatmul.f32.gmra.mxu0 %v252
      %v1165 = vpop.f32.mrf.mxu0
      %v1166 = vadd.f32 0.0, %v1165
      %1167 = vdwg.mxu0
      %v1168 = vadd.f32 %v1087, %v1121
      %v1169 = vadd.f32 %v1088, %v1124
      %v1170 = vadd.f32 %v1089, %v1127
      %v1171 = vadd.f32 %v1090, %v1130
      %v1172 = vadd.f32 %v1091, %v1133
      %v1173 = vadd.f32 %v1092, %v1136
      %v1174 = vadd.f32 %v1093, %v1139
      %v1175 = vadd.f32 %v1094, %v1142
      %v1176 = vadd.f32 %v1095, %v1145
      %v1177 = vadd.f32 %v1096, %v1148
      %v1178 = vadd.f32 %v1097, %v1151
      %v1179 = vadd.f32 %v1098, %v1154
      %v1180 = vadd.f32 %v1099, %v1157
      %v1181 = vadd.f32 %v1100, %v1160
      %v1182 = vadd.f32 %v1101, %v1163
      %v1183 = vadd.f32 %v1102, %v1166
      %v1184 = vtanh.pop %v1168
      %v1185 = vtanh.pop %v1169
      %v1186 = vtanh.pop %v1170
      %v1187 = vtanh.pop %v1171
      %v1188 = vtanh.pop %v1172
      %v1189 = vtanh.pop %v1173
      %v1190 = vtanh.pop %v1174
      %v1191 = vtanh.pop %v1175
      %v1192 = vtanh.pop %v1176
      %v1193 = vtanh.pop %v1177
      %v1194 = vtanh.pop %v1178
      %v1195 = vtanh.pop %v1179
      %v1196 = vtanh.pop %v1180
      %v1197 = vtanh.pop %v1181
      %v1198 = vtanh.pop %v1182
      %v1199 = vtanh.pop %v1183
      %s1200 = sadd.s32 %s285, 4
      %p1201 = scmp.lt.s32.totalorder %s1200, 12
      %s1202 = scalar_select %p1201, 1, 0
      %v1203 = vstv %s1202
      %vm1204 = vcmp.eq.s32.totalorder %v1203, 1
      %v1205 = vsel %vm1204, %v1184, %v1053
      %v1206 = vsel %vm1204, %v1185, %v1054
      %v1207 = vsel %vm1204, %v1186, %v1055
      %v1208 = vsel %vm1204, %v1187, %v1056
      %v1209 = vsel %vm1204, %v1188, %v1057
      %v1210 = vsel %vm1204, %v1189, %v1058
      %v1211 = vsel %vm1204, %v1190, %v1059
      %v1212 = vsel %vm1204, %v1191, %v1060
      %v1213 = vsel %vm1204, %v1192, %v1061
      %v1214 = vsel %vm1204, %v1193, %v1062
      %v1215 = vsel %vm1204, %v1194, %v1063
      %v1216 = vsel %vm1204, %v1195, %v1064
      %v1217 = vsel %vm1204, %v1196, %v1065
      %v1218 = vsel %vm1204, %v1197, %v1066
      %v1219 = vsel %vm1204, %v1198, %v1067
      %v1220 = vsel %vm1204, %v1199, %v1068
      %v1221 = vld [vmem:[%s211 + $0x5] sm:$0x1]
      %v1222 = vperm.slane %v1221, 0
      %v1223 = vmul.f32 %v306, %v1222
      %v1224 = vmul.f32 %v311, %v1222
      %v1225 = vmul.f32 %v316, %v1222
      %v1226 = vmul.f32 %v321, %v1222
      %v1227 = vmul.f32 %v326, %v1222
      %v1228 = vmul.f32 %v331, %v1222
      %v1229 = vmul.f32 %v336, %v1222
      %v1230 = vmul.f32 %v341, %v1222
      %v1231 = vmul.f32 %v346, %v1222
      %v1232 = vmul.f32 %v351, %v1222
      %v1233 = vmul.f32 %v356, %v1222
      %v1234 = vmul.f32 %v361, %v1222
      %v1235 = vmul.f32 %v366, %v1222
      %v1236 = vmul.f32 %v371, %v1222
      %v1237 = vmul.f32 %v376, %v1222
      %v1238 = vmul.f32 %v381, %v1222
      %v1239 = vadd.f32 %v1223, %v403
      %v1240 = vadd.f32 %v1224, %v408
      %v1241 = vadd.f32 %v1225, %v413
      %v1242 = vadd.f32 %v1226, %v418
      %v1243 = vadd.f32 %v1227, %v423
      %v1244 = vadd.f32 %v1228, %v428
      %v1245 = vadd.f32 %v1229, %v433
      %v1246 = vadd.f32 %v1230, %v438
      %v1247 = vadd.f32 %v1231, %v443
      %v1248 = vadd.f32 %v1232, %v448
      %v1249 = vadd.f32 %v1233, %v453
      %v1250 = vadd.f32 %v1234, %v458
      %v1251 = vadd.f32 %v1235, %v463
      %v1252 = vadd.f32 %v1236, %v468
      %v1253 = vadd.f32 %v1237, %v473
      %v1254 = vadd.f32 %v1238, %v478
      %1255 = vmatpush.msra.mxu0 %v1220
      %1256 = vmatpush.msra.mxu0 %v1219
      %1257 = vmatpush.msra.mxu0 %v1218
      %1258 = vmatpush.msra.mxu0 %v1217
      %1259 = vmatpush.msra.mxu0 %v1216
      %1260 = vmatpush.msra.mxu0 %v1215
      %1261 = vmatpush.msra.mxu0 %v1214
      %1262 = vmatpush.msra.mxu0 %v1213
      %1263 = vmatpush.msra.mxu0 %v1212
      %1264 = vmatpush.msra.mxu0 %v1211
      %1265 = vmatpush.msra.mxu0 %v1210
      %1266 = vmatpush.msra.mxu0 %v1209
      %1267 = vmatpush.msra.mxu0 %v1208
      %1268 = vmatpush.msra.mxu0 %v1207
      %1269 = vmatpush.msra.mxu0 %v1206
      %1270 = vmatpush.msra.mxu0 %v1205
      %1271 = vmatmul.f32.gmra.mxu0 %v237
      %v1272 = vpop.f32.mrf.mxu0
      %v1273 = vadd.f32 0.0, %v1272
      %1274 = vmatmul.f32.gmra.mxu0 %v238
      %v1275 = vpop.f32.mrf.mxu0
      %v1276 = vadd.f32 0.0, %v1275
      %1277 = vmatmul.f32.gmra.mxu0 %v239
      %v1278 = vpop.f32.mrf.mxu0
      %v1279 = vadd.f32 0.0, %v1278
      %1280 = vmatmul.f32.gmra.mxu0 %v240
      %v1281 = vpop.f32.mrf.mxu0
      %v1282 = vadd.f32 0.0, %v1281
      %1283 = vmatmul.f32.gmra.mxu0 %v241
      %v1284 = vpop.f32.mrf.mxu0
      %v1285 = vadd.f32 0.0, %v1284
      %1286 = vmatmul.f32.gmra.mxu0 %v242
      %v1287 = vpop.f32.mrf.mxu0
      %v1288 = vadd.f32 0.0, %v1287
      %1289 = vmatmul.f32.gmra.mxu0 %v243
      %v1290 = vpop.f32.mrf.mxu0
      %v1291 = vadd.f32 0.0, %v1290
      %1292 = vmatmul.f32.gmra.mxu0 %v244
      %v1293 = vpop.f32.mrf.mxu0
      %v1294 = vadd.f32 0.0, %v1293
      %1295 = vmatmul.f32.gmra.mxu0 %v245
      %v1296 = vpop.f32.mrf.mxu0
      %v1297 = vadd.f32 0.0, %v1296
      %1298 = vmatmul.f32.gmra.mxu0 %v246
      %v1299 = vpop.f32.mrf.mxu0
      %v1300 = vadd.f32 0.0, %v1299
      %1301 = vmatmul.f32.gmra.mxu0 %v247
      %v1302 = vpop.f32.mrf.mxu0
      %v1303 = vadd.f32 0.0, %v1302
      %1304 = vmatmul.f32.gmra.mxu0 %v248
      %v1305 = vpop.f32.mrf.mxu0
      %v1306 = vadd.f32 0.0, %v1305
      %1307 = vmatmul.f32.gmra.mxu0 %v249
      %v1308 = vpop.f32.mrf.mxu0
      %v1309 = vadd.f32 0.0, %v1308
      %1310 = vmatmul.f32.gmra.mxu0 %v250
      %v1311 = vpop.f32.mrf.mxu0
      %v1312 = vadd.f32 0.0, %v1311
      %1313 = vmatmul.f32.gmra.mxu0 %v251
      %v1314 = vpop.f32.mrf.mxu0
      %v1315 = vadd.f32 0.0, %v1314
      %1316 = vmatmul.f32.gmra.mxu0 %v252
      %v1317 = vpop.f32.mrf.mxu0
      %v1318 = vadd.f32 0.0, %v1317
      %1319 = vdwg.mxu0
      %v1320 = vadd.f32 %v1239, %v1273
      %v1321 = vadd.f32 %v1240, %v1276
      %v1322 = vadd.f32 %v1241, %v1279
      %v1323 = vadd.f32 %v1242, %v1282
      %v1324 = vadd.f32 %v1243, %v1285
      %v1325 = vadd.f32 %v1244, %v1288
      %v1326 = vadd.f32 %v1245, %v1291
      %v1327 = vadd.f32 %v1246, %v1294
      %v1328 = vadd.f32 %v1247, %v1297
      %v1329 = vadd.f32 %v1248, %v1300
      %v1330 = vadd.f32 %v1249, %v1303
      %v1331 = vadd.f32 %v1250, %v1306
      %v1332 = vadd.f32 %v1251, %v1309
      %v1333 = vadd.f32 %v1252, %v1312
      %v1334 = vadd.f32 %v1253, %v1315
      %v1335 = vadd.f32 %v1254, %v1318
      %v1336 = vtanh.pop %v1320
      %v1337 = vtanh.pop %v1321
      %v1338 = vtanh.pop %v1322
      %v1339 = vtanh.pop %v1323
      %v1340 = vtanh.pop %v1324
      %v1341 = vtanh.pop %v1325
      %v1342 = vtanh.pop %v1326
      %v1343 = vtanh.pop %v1327
      %v1344 = vtanh.pop %v1328
      %v1345 = vtanh.pop %v1329
      %v1346 = vtanh.pop %v1330
      %v1347 = vtanh.pop %v1331
      %v1348 = vtanh.pop %v1332
      %v1349 = vtanh.pop %v1333
      %v1350 = vtanh.pop %v1334
      %v1351 = vtanh.pop %v1335
      %s1352 = sadd.s32 %s285, 5
      %p1353 = scmp.lt.s32.totalorder %s1352, 12
      %s1354 = scalar_select %p1353, 1, 0
      %v1355 = vstv %s1354
      %vm1356 = vcmp.eq.s32.totalorder %v1355, 1
      %v1357 = vsel %vm1356, %v1336, %v1205
      %v1358 = vsel %vm1356, %v1337, %v1206
      %v1359 = vsel %vm1356, %v1338, %v1207
      %v1360 = vsel %vm1356, %v1339, %v1208
      %v1361 = vsel %vm1356, %v1340, %v1209
      %v1362 = vsel %vm1356, %v1341, %v1210
      %v1363 = vsel %vm1356, %v1342, %v1211
      %v1364 = vsel %vm1356, %v1343, %v1212
      %v1365 = vsel %vm1356, %v1344, %v1213
      %v1366 = vsel %vm1356, %v1345, %v1214
      %v1367 = vsel %vm1356, %v1346, %v1215
      %v1368 = vsel %vm1356, %v1347, %v1216
      %v1369 = vsel %vm1356, %v1348, %v1217
      %v1370 = vsel %vm1356, %v1349, %v1218
      %v1371 = vsel %vm1356, %v1350, %v1219
      %v1372 = vsel %vm1356, %v1351, %v1220
      %v1373 = vld [vmem:[%s211 + $0x6] sm:$0x1]
      %v1374 = vperm.slane %v1373, 0
      %v1375 = vmul.f32 %v306, %v1374
      %v1376 = vmul.f32 %v311, %v1374
      %v1377 = vmul.f32 %v316, %v1374
      %v1378 = vmul.f32 %v321, %v1374
      %v1379 = vmul.f32 %v326, %v1374
      %v1380 = vmul.f32 %v331, %v1374
      %v1381 = vmul.f32 %v336, %v1374
      %v1382 = vmul.f32 %v341, %v1374
      %v1383 = vmul.f32 %v346, %v1374
      %v1384 = vmul.f32 %v351, %v1374
      %v1385 = vmul.f32 %v356, %v1374
      %v1386 = vmul.f32 %v361, %v1374
      %v1387 = vmul.f32 %v366, %v1374
      %v1388 = vmul.f32 %v371, %v1374
      %v1389 = vmul.f32 %v376, %v1374
      %v1390 = vmul.f32 %v381, %v1374
      %v1391 = vadd.f32 %v1375, %v403
      %v1392 = vadd.f32 %v1376, %v408
      %v1393 = vadd.f32 %v1377, %v413
      %v1394 = vadd.f32 %v1378, %v418
      %v1395 = vadd.f32 %v1379, %v423
      %v1396 = vadd.f32 %v1380, %v428
      %v1397 = vadd.f32 %v1381, %v433
      %v1398 = vadd.f32 %v1382, %v438
      %v1399 = vadd.f32 %v1383, %v443
      %v1400 = vadd.f32 %v1384, %v448
      %v1401 = vadd.f32 %v1385, %v453
      %v1402 = vadd.f32 %v1386, %v458
      %v1403 = vadd.f32 %v1387, %v463
      %v1404 = vadd.f32 %v1388, %v468
      %v1405 = vadd.f32 %v1389, %v473
      %v1406 = vadd.f32 %v1390, %v478
      %1407 = vmatpush.msra.mxu0 %v1372
      %1408 = vmatpush.msra.mxu0 %v1371
      %1409 = vmatpush.msra.mxu0 %v1370
      %1410 = vmatpush.msra.mxu0 %v1369
      %1411 = vmatpush.msra.mxu0 %v1368
      %1412 = vmatpush.msra.mxu0 %v1367
      %1413 = vmatpush.msra.mxu0 %v1366
      %1414 = vmatpush.msra.mxu0 %v1365
      %1415 = vmatpush.msra.mxu0 %v1364
      %1416 = vmatpush.msra.mxu0 %v1363
      %1417 = vmatpush.msra.mxu0 %v1362
      %1418 = vmatpush.msra.mxu0 %v1361
      %1419 = vmatpush.msra.mxu0 %v1360
      %1420 = vmatpush.msra.mxu0 %v1359
      %1421 = vmatpush.msra.mxu0 %v1358
      %1422 = vmatpush.msra.mxu0 %v1357
      %1423 = vmatmul.f32.gmra.mxu0 %v237
      %v1424 = vpop.f32.mrf.mxu0
      %v1425 = vadd.f32 0.0, %v1424
      %1426 = vmatmul.f32.gmra.mxu0 %v238
      %v1427 = vpop.f32.mrf.mxu0
      %v1428 = vadd.f32 0.0, %v1427
      %1429 = vmatmul.f32.gmra.mxu0 %v239
      %v1430 = vpop.f32.mrf.mxu0
      %v1431 = vadd.f32 0.0, %v1430
      %1432 = vmatmul.f32.gmra.mxu0 %v240
      %v1433 = vpop.f32.mrf.mxu0
      %v1434 = vadd.f32 0.0, %v1433
      %1435 = vmatmul.f32.gmra.mxu0 %v241
      %v1436 = vpop.f32.mrf.mxu0
      %v1437 = vadd.f32 0.0, %v1436
      %1438 = vmatmul.f32.gmra.mxu0 %v242
      %v1439 = vpop.f32.mrf.mxu0
      %v1440 = vadd.f32 0.0, %v1439
      %1441 = vmatmul.f32.gmra.mxu0 %v243
      %v1442 = vpop.f32.mrf.mxu0
      %v1443 = vadd.f32 0.0, %v1442
      %1444 = vmatmul.f32.gmra.mxu0 %v244
      %v1445 = vpop.f32.mrf.mxu0
      %v1446 = vadd.f32 0.0, %v1445
      %1447 = vmatmul.f32.gmra.mxu0 %v245
      %v1448 = vpop.f32.mrf.mxu0
      %v1449 = vadd.f32 0.0, %v1448
      %1450 = vmatmul.f32.gmra.mxu0 %v246
      %v1451 = vpop.f32.mrf.mxu0
      %v1452 = vadd.f32 0.0, %v1451
      %1453 = vmatmul.f32.gmra.mxu0 %v247
      %v1454 = vpop.f32.mrf.mxu0
      %v1455 = vadd.f32 0.0, %v1454
      %1456 = vmatmul.f32.gmra.mxu0 %v248
      %v1457 = vpop.f32.mrf.mxu0
      %v1458 = vadd.f32 0.0, %v1457
      %1459 = vmatmul.f32.gmra.mxu0 %v249
      %v1460 = vpop.f32.mrf.mxu0
      %v1461 = vadd.f32 0.0, %v1460
      %1462 = vmatmul.f32.gmra.mxu0 %v250
      %v1463 = vpop.f32.mrf.mxu0
      %v1464 = vadd.f32 0.0, %v1463
      %1465 = vmatmul.f32.gmra.mxu0 %v251
      %v1466 = vpop.f32.mrf.mxu0
      %v1467 = vadd.f32 0.0, %v1466
      %1468 = vmatmul.f32.gmra.mxu0 %v252
      %v1469 = vpop.f32.mrf.mxu0
      %v1470 = vadd.f32 0.0, %v1469
      %1471 = vdwg.mxu0
      %v1472 = vadd.f32 %v1391, %v1425
      %v1473 = vadd.f32 %v1392, %v1428
      %v1474 = vadd.f32 %v1393, %v1431
      %v1475 = vadd.f32 %v1394, %v1434
      %v1476 = vadd.f32 %v1395, %v1437
      %v1477 = vadd.f32 %v1396, %v1440
      %v1478 = vadd.f32 %v1397, %v1443
      %v1479 = vadd.f32 %v1398, %v1446
      %v1480 = vadd.f32 %v1399, %v1449
      %v1481 = vadd.f32 %v1400, %v1452
      %v1482 = vadd.f32 %v1401, %v1455
      %v1483 = vadd.f32 %v1402, %v1458
      %v1484 = vadd.f32 %v1403, %v1461
      %v1485 = vadd.f32 %v1404, %v1464
      %v1486 = vadd.f32 %v1405, %v1467
      %v1487 = vadd.f32 %v1406, %v1470
      %v1488 = vtanh.pop %v1472
      %v1489 = vtanh.pop %v1473
      %v1490 = vtanh.pop %v1474
      %v1491 = vtanh.pop %v1475
      %v1492 = vtanh.pop %v1476
      %v1493 = vtanh.pop %v1477
      %v1494 = vtanh.pop %v1478
      %v1495 = vtanh.pop %v1479
      %v1496 = vtanh.pop %v1480
      %v1497 = vtanh.pop %v1481
      %v1498 = vtanh.pop %v1482
      %v1499 = vtanh.pop %v1483
      %v1500 = vtanh.pop %v1484
      %v1501 = vtanh.pop %v1485
      %v1502 = vtanh.pop %v1486
      %v1503 = vtanh.pop %v1487
      %s1504 = sadd.s32 %s285, 6
      %p1505 = scmp.lt.s32.totalorder %s1504, 12
      %s1506 = scalar_select %p1505, 1, 0
      %v1507 = vstv %s1506
      %vm1508 = vcmp.eq.s32.totalorder %v1507, 1
      %v1509 = vsel %vm1508, %v1488, %v1357
      %v1510 = vsel %vm1508, %v1489, %v1358
      %v1511 = vsel %vm1508, %v1490, %v1359
      %v1512 = vsel %vm1508, %v1491, %v1360
      %v1513 = vsel %vm1508, %v1492, %v1361
      %v1514 = vsel %vm1508, %v1493, %v1362
      %v1515 = vsel %vm1508, %v1494, %v1363
      %v1516 = vsel %vm1508, %v1495, %v1364
      %v1517 = vsel %vm1508, %v1496, %v1365
      %v1518 = vsel %vm1508, %v1497, %v1366
      %v1519 = vsel %vm1508, %v1498, %v1367
      %v1520 = vsel %vm1508, %v1499, %v1368
      %v1521 = vsel %vm1508, %v1500, %v1369
      %v1522 = vsel %vm1508, %v1501, %v1370
      %v1523 = vsel %vm1508, %v1502, %v1371
      %v1524 = vsel %vm1508, %v1503, %v1372
      %v1525 = vld [vmem:[%s211 + $0x7] sm:$0x1]
      %v1526 = vperm.slane %v1525, 0
      %v1527 = vmul.f32 %v306, %v1526
      %v1528 = vmul.f32 %v311, %v1526
      %v1529 = vmul.f32 %v316, %v1526
      %v1530 = vmul.f32 %v321, %v1526
      %v1531 = vmul.f32 %v326, %v1526
      %v1532 = vmul.f32 %v331, %v1526
      %v1533 = vmul.f32 %v336, %v1526
      %v1534 = vmul.f32 %v341, %v1526
      %v1535 = vmul.f32 %v346, %v1526
      %v1536 = vmul.f32 %v351, %v1526
      %v1537 = vmul.f32 %v356, %v1526
      %v1538 = vmul.f32 %v361, %v1526
      %v1539 = vmul.f32 %v366, %v1526
      %v1540 = vmul.f32 %v371, %v1526
      %v1541 = vmul.f32 %v376, %v1526
      %v1542 = vmul.f32 %v381, %v1526
      %v1543 = vadd.f32 %v1527, %v403
      %v1544 = vadd.f32 %v1528, %v408
      %v1545 = vadd.f32 %v1529, %v413
      %v1546 = vadd.f32 %v1530, %v418
      %v1547 = vadd.f32 %v1531, %v423
      %v1548 = vadd.f32 %v1532, %v428
      %v1549 = vadd.f32 %v1533, %v433
      %v1550 = vadd.f32 %v1534, %v438
      %v1551 = vadd.f32 %v1535, %v443
      %v1552 = vadd.f32 %v1536, %v448
      %v1553 = vadd.f32 %v1537, %v453
      %v1554 = vadd.f32 %v1538, %v458
      %v1555 = vadd.f32 %v1539, %v463
      %v1556 = vadd.f32 %v1540, %v468
      %v1557 = vadd.f32 %v1541, %v473
      %v1558 = vadd.f32 %v1542, %v478
      %1559 = vmatpush.msra.mxu0 %v1524
      %1560 = vmatpush.msra.mxu0 %v1523
      %1561 = vmatpush.msra.mxu0 %v1522
      %1562 = vmatpush.msra.mxu0 %v1521
      %1563 = vmatpush.msra.mxu0 %v1520
      %1564 = vmatpush.msra.mxu0 %v1519
      %1565 = vmatpush.msra.mxu0 %v1518
      %1566 = vmatpush.msra.mxu0 %v1517
      %1567 = vmatpush.msra.mxu0 %v1516
      %1568 = vmatpush.msra.mxu0 %v1515
      %1569 = vmatpush.msra.mxu0 %v1514
      %1570 = vmatpush.msra.mxu0 %v1513
      %1571 = vmatpush.msra.mxu0 %v1512
      %1572 = vmatpush.msra.mxu0 %v1511
      %1573 = vmatpush.msra.mxu0 %v1510
      %1574 = vmatpush.msra.mxu0 %v1509
      %1575 = vmatmul.f32.gmra.mxu0 %v237
      %v1576 = vpop.f32.mrf.mxu0
      %v1577 = vadd.f32 0.0, %v1576
      %1578 = vmatmul.f32.gmra.mxu0 %v238
      %v1579 = vpop.f32.mrf.mxu0
      %v1580 = vadd.f32 0.0, %v1579
      %1581 = vmatmul.f32.gmra.mxu0 %v239
      %v1582 = vpop.f32.mrf.mxu0
      %v1583 = vadd.f32 0.0, %v1582
      %1584 = vmatmul.f32.gmra.mxu0 %v240
      %v1585 = vpop.f32.mrf.mxu0
      %v1586 = vadd.f32 0.0, %v1585
      %1587 = vmatmul.f32.gmra.mxu0 %v241
      %v1588 = vpop.f32.mrf.mxu0
      %v1589 = vadd.f32 0.0, %v1588
      %1590 = vmatmul.f32.gmra.mxu0 %v242
      %v1591 = vpop.f32.mrf.mxu0
      %v1592 = vadd.f32 0.0, %v1591
      %1593 = vmatmul.f32.gmra.mxu0 %v243
      %v1594 = vpop.f32.mrf.mxu0
      %v1595 = vadd.f32 0.0, %v1594
      %1596 = vmatmul.f32.gmra.mxu0 %v244
      %v1597 = vpop.f32.mrf.mxu0
      %v1598 = vadd.f32 0.0, %v1597
      %1599 = vmatmul.f32.gmra.mxu0 %v245
      %v1600 = vpop.f32.mrf.mxu0
      %v1601 = vadd.f32 0.0, %v1600
      %1602 = vmatmul.f32.gmra.mxu0 %v246
      %v1603 = vpop.f32.mrf.mxu0
      %v1604 = vadd.f32 0.0, %v1603
      %1605 = vmatmul.f32.gmra.mxu0 %v247
      %v1606 = vpop.f32.mrf.mxu0
      %v1607 = vadd.f32 0.0, %v1606
      %1608 = vmatmul.f32.gmra.mxu0 %v248
      %v1609 = vpop.f32.mrf.mxu0
      %v1610 = vadd.f32 0.0, %v1609
      %1611 = vmatmul.f32.gmra.mxu0 %v249
      %v1612 = vpop.f32.mrf.mxu0
      %v1613 = vadd.f32 0.0, %v1612
      %1614 = vmatmul.f32.gmra.mxu0 %v250
      %v1615 = vpop.f32.mrf.mxu0
      %v1616 = vadd.f32 0.0, %v1615
      %1617 = vmatmul.f32.gmra.mxu0 %v251
      %v1618 = vpop.f32.mrf.mxu0
      %v1619 = vadd.f32 0.0, %v1618
      %1620 = vmatmul.f32.gmra.mxu0 %v252
      %v1621 = vpop.f32.mrf.mxu0
      %v1622 = vadd.f32 0.0, %v1621
      %1623 = vdwg.mxu0
      %v1624 = vadd.f32 %v1543, %v1577
      %v1625 = vadd.f32 %v1544, %v1580
      %v1626 = vadd.f32 %v1545, %v1583
      %v1627 = vadd.f32 %v1546, %v1586
      %v1628 = vadd.f32 %v1547, %v1589
      %v1629 = vadd.f32 %v1548, %v1592
      %v1630 = vadd.f32 %v1549, %v1595
      %v1631 = vadd.f32 %v1550, %v1598
      %v1632 = vadd.f32 %v1551, %v1601
      %v1633 = vadd.f32 %v1552, %v1604
      %v1634 = vadd.f32 %v1553, %v1607
      %v1635 = vadd.f32 %v1554, %v1610
      %v1636 = vadd.f32 %v1555, %v1613
      %v1637 = vadd.f32 %v1556, %v1616
      %v1638 = vadd.f32 %v1557, %v1619
      %v1639 = vadd.f32 %v1558, %v1622
      %v1640 = vtanh.pop %v1624
      %v1641 = vtanh.pop %v1625
      %v1642 = vtanh.pop %v1626
      %v1643 = vtanh.pop %v1627
      %v1644 = vtanh.pop %v1628
      %v1645 = vtanh.pop %v1629
      %v1646 = vtanh.pop %v1630
      %v1647 = vtanh.pop %v1631
      %v1648 = vtanh.pop %v1632
      %v1649 = vtanh.pop %v1633
      %v1650 = vtanh.pop %v1634
      %v1651 = vtanh.pop %v1635
      %v1652 = vtanh.pop %v1636
      %v1653 = vtanh.pop %v1637
      %v1654 = vtanh.pop %v1638
      %v1655 = vtanh.pop %v1639
      %s1656 = sadd.s32 %s285, 7
      %p1657 = scmp.lt.s32.totalorder %s1656, 12
      %s1658 = scalar_select %p1657, 1, 0
      %v1659 = vstv %s1658
      %vm1660 = vcmp.eq.s32.totalorder %v1659, 1
      %v1661 = vsel %vm1660, %v1640, %v1509
      %v1662 = vsel %vm1660, %v1641, %v1510
      %v1663 = vsel %vm1660, %v1642, %v1511
      %v1664 = vsel %vm1660, %v1643, %v1512
      %v1665 = vsel %vm1660, %v1644, %v1513
      %v1666 = vsel %vm1660, %v1645, %v1514
      %v1667 = vsel %vm1660, %v1646, %v1515
      %v1668 = vsel %vm1660, %v1647, %v1516
      %v1669 = vsel %vm1660, %v1648, %v1517
      %v1670 = vsel %vm1660, %v1649, %v1518
      %v1671 = vsel %vm1660, %v1650, %v1519
      %v1672 = vsel %vm1660, %v1651, %v1520
      %v1673 = vsel %vm1660, %v1652, %v1521
      %v1674 = vsel %vm1660, %v1653, %v1522
      %v1675 = vsel %vm1660, %v1654, %v1523
      %v1676 = vsel %vm1660, %v1655, %v1524
      %vm1677 = vcmask 64512
      %1678 = vst.msk [vmem:[%s215] sm:$0xff] %vm1677, %v1661
      %1679 = vst.msk [vmem:[%s215 + $0x8] sm:$0xff] %vm1677, %v1662
      %1680 = vst.msk [vmem:[%s215 + $0x10] sm:$0xff] %vm1677, %v1663
      %1681 = vst.msk [vmem:[%s215 + $0x18] sm:$0xff] %vm1677, %v1664
      %1682 = vst.msk [vmem:[%s215 + $0x20] sm:$0xff] %vm1677, %v1665
      %1683 = vst.msk [vmem:[%s215 + $0x28] sm:$0xff] %vm1677, %v1666
      %1684 = vst.msk [vmem:[%s215 + $0x30] sm:$0xff] %vm1677, %v1667
      %1685 = vst.msk [vmem:[%s215 + $0x38] sm:$0xff] %vm1677, %v1668
      %1686 = vst.msk [vmem:[%s215 + $0x40] sm:$0xff] %vm1677, %v1669
      %1687 = vst.msk [vmem:[%s215 + $0x48] sm:$0xff] %vm1677, %v1670
      %1688 = vst.msk [vmem:[%s215 + $0x50] sm:$0xff] %vm1677, %v1671
      %1689 = vst.msk [vmem:[%s215 + $0x58] sm:$0xff] %vm1677, %v1672
      %1690 = vst.msk [vmem:[%s215 + $0x60] sm:$0xff] %vm1677, %v1673
      %1691 = vst.msk [vmem:[%s215 + $0x68] sm:$0xff] %vm1677, %v1674
      %1692 = vst.msk [vmem:[%s215 + $0x70] sm:$0xff] %vm1677, %v1675
      %1693 = vst.msk [vmem:[%s215 + $0x78] sm:$0xff] %vm1677, %v1676
      %p1694 = scmp.lt.s32.totalorder %s19, 0
      %s1695 = scalar_select %p1694, %s19, 0
      %s1696 = smul.addr %s1695, 8
      %s1697 = scalar_lea.vmem %s4, %s1696
      // Predicated region
      $region41: #{tpu_custom_call.1} parent=35 // pred_check
        %p1698 = pneg %p136
      $region42: #{tpu_custom_call.1} parent=35 // pred_check_branch
        %1700 = sbr.rel (%p1698) target = $region44
      $region43: #{tpu_custom_call.1} parent=35 // pred_region
        _
      $region44: #{tpu_custom_call.1} parent=35 // pred_fallthru
        _
      // Predicated region
      $region45: #{tpu_custom_call.1} parent=35 // pred_check
        %p1701 = pneg %p136
      $region46: #{tpu_custom_call.1} parent=35 // pred_check_branch
        %1703 = sbr.rel (%p1701) target = $region48
      $region47: #{tpu_custom_call.1} parent=35 // pred_region
        %p1704 = scmp.lt.s32.totalorder %s19, 0
        %s1705 = scalar_select %p1704, %s19, 0
        %s1706 = smul.addr %s1705, 8
        %s1707 = scalar_lea.vmem %s4, %s1706
      $region48: #{tpu_custom_call.1} parent=35 // pred_fallthru
        _
    $region36: #{tpu_custom_call.1} parent=5 // pred_fallthru
      _
    %p1708 = scmp.le.s32.totalorder 2, %s10
    // Predicated region
    $region49: #{tpu_custom_call.1} parent=5 // pred_check
      %p1709 = pneg %p1708
    $region50: #{tpu_custom_call.1} parent=5 // pred_check_branch
      %1711 = sbr.rel (%p1709) target = $region52
    $region51: #{tpu_custom_call.1} parent=5 // pred_region
      %s1712 = ssub.s32 %s10, 2
    $region52: #{tpu_custom_call.1} parent=5 // pred_fallthru
      _
  $region6: #{tpu_custom_call.1} parent=0 // loop_footer
    %s14 = sadd.s32 1, %s10
  $region7: #{tpu_custom_call.1} parent=0 // loop_footer_branch
    %9 = sbr.rel target = $region3
  $region8: #{tpu_custom_call.1} parent=0 // loop_exit
    _

</llo_original>
